<compile_context>
chip_gen: v5e
topology: v5e:2x2
jax: 0.10.0
libtpu: 0.0.40
codegen_flags: <defaults>
</compile_context>

<pallas_src>
import functools

import jax
import jax.numpy as jnp
from jax.experimental import pallas as pl
from jax.experimental.pallas import tpu as pltpu


def _disc_kernel(x_ref, c_ref, w1x_ref, w1c_ref, b1_ref, w2_ref, b2_ref,
                 w3_ref, b3_ref, o_ref, *, approx_sigmoid=False):
    """Whole 3-layer MLP forward for one batch tile, entirely in VMEM."""
    # Layer 1: split-K (x and cond kept separate -> no wrapper concat pass).
    h1 = jnp.dot(x_ref[...], w1x_ref[...], preferred_element_type=jnp.float32)
    h1 = h1 + jnp.dot(c_ref[...], w1c_ref[...],
                      preferred_element_type=jnp.float32)
    h1 = h1 + b1_ref[...]
    h1 = jnp.where(h1 > 0, h1, 0.2 * h1)                      # LeakyReLU(0.2)

    # Layer 2: (bt, 256) @ (256, 128) + b2, LeakyReLU(0.2) in f32.
    h2 = jnp.dot(h1.astype(w2_ref.dtype), w2_ref[...],
                 preferred_element_type=jnp.float32)
    h2 = h2 + b2_ref[...]
    h2 = jnp.where(h2 > 0, h2, 0.2 * h2)

    # Layer 3: N=1 output -> VPU multiply + lane reduce (MXU stays free).
    z = jnp.sum(h2 * w3_ref[...], axis=-1, keepdims=True) + b3_ref[0, 0]

    # Sigmoid; approx=True in prod routes the divide to the EUP slot.
    sig = pl.reciprocal(1.0 + jnp.exp(-z), approx=approx_sigmoid)  # (bt, 1)
    o_ref[...] = sig.astype(o_ref.dtype)


def discriminator_forward(x, cond, params, *, batch_tile=256,
                          dtype=jnp.float32, approx_sigmoid=False):
    """x: (B, in_dim), cond: (B, cond_dim) -> (B, 1) f32 sigmoid scores."""
    B, in_dim = x.shape
    _, cond_dim = cond.shape
    w1, b1, w2, b2, w3, b3 = params
    h1_dim = w1.shape[1]
    h2_dim = w2.shape[1]
    assert w1.shape[0] == in_dim + cond_dim
    assert batch_tile % 8 == 0, "batch_tile must be a multiple of 8 (sublanes)"

    # Split W1 so the concat never materializes; weights in the compute dtype,
    # biases / W3 row stay f32 (f32 accumulation + f32 VPU epilogue).
    w1x = w1[:in_dim].astype(dtype)                 # (in_dim,   256)
    w1c = w1[in_dim:].astype(dtype)                 # (cond_dim, 256)
    w2c = w2.astype(dtype)                          # (256, 128)
    w3_row = w3.reshape(1, h2_dim).astype(jnp.float32)   # (1, 128) VPU operand
    b1c = b1.reshape(1, h1_dim).astype(jnp.float32)
    b2c = b2.reshape(1, h2_dim).astype(jnp.float32)
    b3c = b3.reshape(1, 1).astype(jnp.float32)      # scalar via SMEM

    x = x.astype(dtype)
    cond = cond.astype(dtype)

    # Pad batch to a multiple of the tile only when actually needed.
    padded_b = batch_tile * pl.cdiv(B, batch_tile)
    if padded_b != B:
        x = jnp.pad(x, ((0, padded_b - B), (0, 0)))
        cond = jnp.pad(cond, ((0, padded_b - B), (0, 0)))
    grid = (padded_b // batch_tile,)

    full = lambda shape: pl.BlockSpec(shape, lambda i: (0,) * len(shape))

    out_padded = pl.pallas_call(
        functools.partial(_disc_kernel, approx_sigmoid=approx_sigmoid),
        out_shape=jax.ShapeDtypeStruct((padded_b, 1), jnp.float32),
        grid_spec=pltpu.PrefetchScalarGridSpec(
            num_scalar_prefetch=0,
            grid=grid,
            in_specs=[
                pl.BlockSpec((batch_tile, in_dim), lambda i: (i, 0)),    # x
                pl.BlockSpec((batch_tile, cond_dim), lambda i: (i, 0)),  # cond
                full((in_dim, h1_dim)),                                  # W1[:in]
                full((cond_dim, h1_dim)),                                # W1[in:]
                full((1, h1_dim)),                                       # b1
                full((h1_dim, h2_dim)),                                  # W2
                full((1, h2_dim)),                                       # b2
                full((1, h2_dim)),                                       # W3 row
                pl.BlockSpec(memory_space=pltpu.MemorySpace.SMEM),       # b3
            ],
            out_specs=pl.BlockSpec((batch_tile, 1), lambda i: (i, 0)),
        ),
        compiler_params=pltpu.CompilerParams(
            dimension_semantics=("parallel",)),
    )(x, cond, w1x, w1c, b1c, w2c, b2c, w3_row, b3c)

    return out_padded[:B] if padded_b != B else out_padded


def init_params(key, in_dim, cond_dim, h1=256, h2=128):
    """Deterministic synthetic weights, stored as (in, out) matrices."""
    ks = jax.random.split(key, 6)
    scale = 0.05
    w1 = scale * jax.random.normal(ks[0], (in_dim + cond_dim, h1), jnp.float32)
    b1 = scale * jax.random.normal(ks[1], (1, h1), jnp.float32)
    w2 = scale * jax.random.normal(ks[2], (h1, h2), jnp.float32)
    b2 = scale * jax.random.normal(ks[3], (1, h2), jnp.float32)
    w3 = scale * jax.random.normal(ks[4], (h2, 1), jnp.float32)
    b3 = scale * jax.random.normal(ks[5], (1, 1), jnp.float32)
    return (w1, b1, w2, b2, w3, b3)


def _reference_forward(x, cond, params):
    """Pure-JAX reference mirroring the PyTorch module."""
    w1, b1, w2, b2, w3, b3 = params
    inp = jnp.concatenate([x, cond], axis=1)
    h1 = inp @ w1 + b1
    h1 = jnp.where(h1 > 0, h1, 0.2 * h1)
    h2 = h1 @ w2 + b2
    h2 = jnp.where(h2 > 0, h2, 0.2 * h2)
    z = h2 @ w3 + b3
    return 1.0 / (1.0 + jnp.exp(-z))


if __name__ == "__main__":
    key = jax.random.PRNGKey(0)
    k_x, k_c, k_p = jax.random.split(key, 3)

    # cond_dim = onehot categories + 1 (per the original preprocessing).
    B, in_dim, cond_dim = 512, 12, 5
    x = jax.random.normal(k_x, (B, in_dim), jnp.float32)
    cond = jax.random.normal(k_c, (B, cond_dim), jnp.float32)

    params = init_params(k_p, in_dim, cond_dim)

    # batch_tile=256 -> 2-step parallel grid (keeps both v7x TCs busy).
    out = discriminator_forward(x, cond, params, batch_tile=256)
    out = jax.block_until_ready(out)

    ref = _reference_forward(x, cond, params)
    assert out.shape == (B, 1)
    assert jnp.max(jnp.abs(out - ref)) < 1e-5, "mismatch vs pure-JAX reference"

    print("KERNEL_OK")
</pallas_src>

<mosaic_0001>
module attributes {stable_mosaic.version = 11 : i64} {
  func.func @_disc_kernel(%arg0: i32, %arg1: memref<256x12xf32, #tpu.memory_space<vmem>>, %arg2: memref<256x5xf32, #tpu.memory_space<vmem>>, %arg3: memref<12x256xf32, #tpu.memory_space<vmem>>, %arg4: memref<5x256xf32, #tpu.memory_space<vmem>>, %arg5: memref<1x256xf32, #tpu.memory_space<vmem>>, %arg6: memref<256x128xf32, #tpu.memory_space<vmem>>, %arg7: memref<1x128xf32, #tpu.memory_space<vmem>>, %arg8: memref<1x128xf32, #tpu.memory_space<vmem>>, %arg9: memref<1x1xf32, #tpu.memory_space<smem>>, %arg10: memref<256x1xf32, #tpu.memory_space<vmem>>) attributes {dimension_semantics = [#tpu.dimension_semantics<parallel>], iteration_bounds = array<i64: 2>, scalar_prefetch = 0 : i64, scratch_operands = 0 : i64, tpu.core_type = #tpu.core_type<tc>, window_params = [{transform_indices = @transform_0, window_bounds = array<i64: 256, 12>}, {transform_indices = @transform_1, window_bounds = array<i64: 256, 5>}, {pipeline_mode = #tpu.pipeline_mode<synchronous>, transform_indices = @transform_2, window_bounds = array<i64: 12, 256>}, {pipeline_mode = #tpu.pipeline_mode<synchronous>, transform_indices = @transform_3, window_bounds = array<i64: 5, 256>}, {pipeline_mode = #tpu.pipeline_mode<synchronous>, transform_indices = @transform_4, window_bounds = array<i64: 1, 256>}, {pipeline_mode = #tpu.pipeline_mode<synchronous>, transform_indices = @transform_5, window_bounds = array<i64: 256, 128>}, {pipeline_mode = #tpu.pipeline_mode<synchronous>, transform_indices = @transform_6, window_bounds = array<i64: 1, 128>}, {pipeline_mode = #tpu.pipeline_mode<synchronous>, transform_indices = @transform_7, window_bounds = array<i64: 1, 128>}, {transform_indices = @transform_8, window_bounds = array<i64: 1, 1>}, {transform_indices = @transform_9, window_bounds = array<i64: 256, 1>}]} {
    %c0 = arith.constant 0 : index
    %c0_0 = arith.constant 0 : index
    %0 = vector.load %arg1[%c0, %c0_0] : memref<256x12xf32, #tpu.memory_space<vmem>>, vector<256x12xf32>
    %c0_1 = arith.constant 0 : index
    %c0_2 = arith.constant 0 : index
    %1 = vector.load %arg3[%c0_1, %c0_2] : memref<12x256xf32, #tpu.memory_space<vmem>>, vector<12x256xf32>
    %cst = arith.constant dense<0.000000e+00> : vector<256x256xf32>
    %2 = tpu.matmul %0, %1, %cst {dimension_numbers = #tpu.dot_dimension_numbers<[1], [0], [0], [1], [0, 0, 1, 1], [], []>} : vector<256x12xf32>, vector<12x256xf32>, vector<256x256xf32> -> vector<256x256xf32>
    %c0_3 = arith.constant 0 : index
    %c0_4 = arith.constant 0 : index
    %3 = vector.load %arg2[%c0_3, %c0_4] : memref<256x5xf32, #tpu.memory_space<vmem>>, vector<256x5xf32>
    %c0_5 = arith.constant 0 : index
    %c0_6 = arith.constant 0 : index
    %4 = vector.load %arg4[%c0_5, %c0_6] : memref<5x256xf32, #tpu.memory_space<vmem>>, vector<5x256xf32>
    %cst_7 = arith.constant dense<0.000000e+00> : vector<256x256xf32>
    %5 = tpu.matmul %3, %4, %cst_7 {dimension_numbers = #tpu.dot_dimension_numbers<[1], [0], [0], [1], [0, 0, 1, 1], [], []>} : vector<256x5xf32>, vector<5x256xf32>, vector<256x256xf32> -> vector<256x256xf32>
    %6 = arith.addf %2, %5 : vector<256x256xf32>
    %c0_8 = arith.constant 0 : index
    %c0_9 = arith.constant 0 : index
    %7 = vector.load %arg5[%c0_8, %c0_9] : memref<1x256xf32, #tpu.memory_space<vmem>>, vector<1x256xf32>
    %8 = vector.broadcast %7 : vector<1x256xf32> to vector<256x256xf32>
    %9 = arith.addf %6, %8 : vector<256x256xf32>
    %cst_10 = arith.constant 0.000000e+00 : f32
    %10 = vector.broadcast %cst_10 : f32 to vector<256x256xf32>
    %11 = arith.cmpf ogt, %9, %10 : vector<256x256xf32>
    %cst_11 = arith.constant 2.000000e-01 : f32
    %12 = vector.broadcast %cst_11 : f32 to vector<256x256xf32>
    %13 = arith.mulf %12, %9 : vector<256x256xf32>
    %14 = arith.select %11, %9, %13 : vector<256x256xi1>, vector<256x256xf32>
    %c0_12 = arith.constant 0 : index
    %c0_13 = arith.constant 0 : index
    %15 = vector.load %arg6[%c0_12, %c0_13] : memref<256x128xf32, #tpu.memory_space<vmem>>, vector<256x128xf32>
    %cst_14 = arith.constant dense<0.000000e+00> : vector<256x128xf32>
    %16 = tpu.matmul %14, %15, %cst_14 {dimension_numbers = #tpu.dot_dimension_numbers<[1], [0], [0], [1], [0, 0, 1, 1], [], []>} : vector<256x256xf32>, vector<256x128xf32>, vector<256x128xf32> -> vector<256x128xf32>
    %c0_15 = arith.constant 0 : index
    %c0_16 = arith.constant 0 : index
    %17 = vector.load %arg7[%c0_15, %c0_16] : memref<1x128xf32, #tpu.memory_space<vmem>>, vector<1x128xf32>
    %18 = vector.broadcast %17 : vector<1x128xf32> to vector<256x128xf32>
    %19 = arith.addf %16, %18 : vector<256x128xf32>
    %cst_17 = arith.constant 0.000000e+00 : f32
    %20 = vector.broadcast %cst_17 : f32 to vector<256x128xf32>
    %21 = arith.cmpf ogt, %19, %20 : vector<256x128xf32>
    %cst_18 = arith.constant 2.000000e-01 : f32
    %22 = vector.broadcast %cst_18 : f32 to vector<256x128xf32>
    %23 = arith.mulf %22, %19 : vector<256x128xf32>
    %24 = arith.select %21, %19, %23 : vector<256x128xi1>, vector<256x128xf32>
    %c0_19 = arith.constant 0 : index
    %c0_20 = arith.constant 0 : index
    %25 = vector.load %arg8[%c0_19, %c0_20] : memref<1x128xf32, #tpu.memory_space<vmem>>, vector<1x128xf32>
    %26 = vector.broadcast %25 : vector<1x128xf32> to vector<256x128xf32>
    %27 = arith.mulf %24, %26 : vector<256x128xf32>
    %cst_21 = arith.constant dense<0.000000e+00> : vector<256xf32>
    %28 = vector.multi_reduction <add>, %27, %cst_21 [1] : vector<256x128xf32> to vector<256xf32>
    %29 = vector.shape_cast %28 : vector<256xf32> to vector<256x1xf32>
    %c0_22 = arith.constant 0 : index
    %c0_23 = arith.constant 0 : index
    %30 = memref.load %arg9[%c0_22, %c0_23] : memref<1x1xf32, #tpu.memory_space<smem>>
    %31 = vector.broadcast %30 : f32 to vector<256x1xf32>
    %32 = arith.addf %29, %31 : vector<256x1xf32>
    %cst_24 = arith.constant 0.000000e+00 : f32
    %33 = vector.broadcast %cst_24 : f32 to vector<256x1xf32>
    %34 = arith.subf %33, %32 : vector<256x1xf32>
    %35 = math.exp %34 : vector<256x1xf32>
    %cst_25 = arith.constant 1.000000e+00 : f32
    %36 = vector.broadcast %cst_25 : f32 to vector<256x1xf32>
    %37 = arith.addf %36, %35 : vector<256x1xf32>
    %38 = tpu.reciprocal %37 : vector<256x1xf32> -> vector<256x1xf32>
    %c0_26 = arith.constant 0 : index
    %c0_27 = arith.constant 0 : index
    %39 = vector.load %arg10[%c0_26, %c0_27] : memref<256x1xf32, #tpu.memory_space<vmem>>, vector<256x1xf32>
    tpu.vector_store %arg10[%c0_26, %c0_27], %38 {strides = array<i32>} : memref<256x1xf32, #tpu.memory_space<vmem>>, vector<256x1xf32>,
    return
  }
  func.func @transform_0(%arg0: i32) -> (i32, i32) {
    %c0_i32 = arith.constant 0 : i32
    %c0_i32_0 = arith.constant 0 : i32
    return %arg0, %c0_i32 : i32, i32
  }
  func.func @transform_1(%arg0: i32) -> (i32, i32) {
    %c0_i32 = arith.constant 0 : i32
    %c0_i32_0 = arith.constant 0 : i32
    return %arg0, %c0_i32 : i32, i32
  }
  func.func @transform_2(%arg0: i32) -> (i32, i32) {
    %c0_i32 = arith.constant 0 : i32
    %c0_i32_0 = arith.constant 0 : i32
    %c0_i32_1 = arith.constant 0 : i32
    return %c0_i32, %c0_i32_0 : i32, i32
  }
  func.func @transform_3(%arg0: i32) -> (i32, i32) {
    %c0_i32 = arith.constant 0 : i32
    %c0_i32_0 = arith.constant 0 : i32
    %c0_i32_1 = arith.constant 0 : i32
    return %c0_i32, %c0_i32_0 : i32, i32
  }
  func.func @transform_4(%arg0: i32) -> (i32, i32) {
    %c0_i32 = arith.constant 0 : i32
    %c0_i32_0 = arith.constant 0 : i32
    %c0_i32_1 = arith.constant 0 : i32
    return %c0_i32, %c0_i32_0 : i32, i32
  }
  func.func @transform_5(%arg0: i32) -> (i32, i32) {
    %c0_i32 = arith.constant 0 : i32
    %c0_i32_0 = arith.constant 0 : i32
    %c0_i32_1 = arith.constant 0 : i32
    return %c0_i32, %c0_i32_0 : i32, i32
  }
  func.func @transform_6(%arg0: i32) -> (i32, i32) {
    %c0_i32 = arith.constant 0 : i32
    %c0_i32_0 = arith.constant 0 : i32
    %c0_i32_1 = arith.constant 0 : i32
    return %c0_i32, %c0_i32_0 : i32, i32
  }
  func.func @transform_7(%arg0: i32) -> (i32, i32) {
    %c0_i32 = arith.constant 0 : i32
    %c0_i32_0 = arith.constant 0 : i32
    %c0_i32_1 = arith.constant 0 : i32
    return %c0_i32, %c0_i32_0 : i32, i32
  }
  func.func @transform_8(%arg0: i32) -> (i32, i32) {
    %c0_i32 = arith.constant 0 : i32
    %c0_i32_0 = arith.constant 0 : i32
    %c0_i32_1 = arith.constant 0 : i32
    return %c0_i32, %c0_i32_0 : i32, i32
  }
  func.func @transform_9(%arg0: i32) -> (i32, i32) {
    %c0_i32 = arith.constant 0 : i32
    %c0_i32_0 = arith.constant 0 : i32
    return %arg0, %c0_i32 : i32, i32
  }
}

</mosaic_0001>

<llo_original>
// kernel: tpu_custom_call.1
$region0: #{tpu_custom_call.1}
  #allocation0 [shape = 'u32[]', space=smem, size = 0x4, offset = 0x4, fixed_abs, tag = 'smem constant byte address 0x4 - core index']
  #allocation1 [shape = 'u32[72,128]{1,0:T(1,128)}', space=vmem, size = 0x9000, scoped, tag = 'internal scratch']
  #allocation2 [shape = 'f32[1,1]{1,0:T(1,128)S(6)}', space=smem, size = 0x200, scoped, tag = 'scoped memory for tpu_custom_call.1']
  %s0 = inlined_call_operand.vmem [shape: f32[512,12], index: 0, kind: input, shape index: {}]
  %s1 = inlined_call_operand.vmem [shape: f32[512,5], index: 1, kind: input, shape index: {}]
  %s2 = inlined_call_operand.vmem [shape: f32[12,256], index: 2, kind: input, shape index: {}]
  %s3 = inlined_call_operand.vmem [shape: f32[5,256], index: 3, kind: input, shape index: {}]
  %s4 = inlined_call_operand.vmem [shape: f32[1,256], index: 4, kind: input, shape index: {}]
  %s5 = inlined_call_operand.vmem [shape: f32[256,128], index: 5, kind: input, shape index: {}]
  %s6 = inlined_call_operand.vmem [shape: f32[1,128], index: 6, kind: input, shape index: {}]
  %s7 = inlined_call_operand.vmem [shape: f32[1,128], index: 7, kind: input, shape index: {}]
  %s8 = inlined_call_operand.<no memory space> [shape: f32[1,1], index: 8, kind: input, shape index: {}]
  %s9 = inlined_call_operand.vmem [shape: f32[512,1], index: 9, kind: output, shape index: {}]
  %s10 = sld [smem:[#allocation0]]
  $region69: #{tpu_custom_call.1} parent=0
    _
  %s12 = ssub.s32 1, %s10
  %s13 = scalar_select 0, %s12, %s10
  %14 = sst [smem:[#allocation2]] %s8
  loop: start=0, step=1, limit=4
  $region2: #{tpu_custom_call.1} parent=0 // loop_pre_header
    _
  $region3: #{tpu_custom_call.1} parent=0 // loop_header
    %s16 = sphi 0, %s20
    %p17 = scmp.ge.s32.totalorder %s16, 4
    %s26 = sphi 0, %s28
    %s29 = sphi 0, %s26
    %s30 = sphi 0, %s29
    %s46 = sphi 0, %s30
    %s52 = sphi 0, %s54
    %s55 = sphi 0, %s52
    %s56 = sphi 0, %s55
    %s72 = sphi 0, %s56
    %s76 = sphi 0, %s76
    %s78 = sphi 0, %s76
    %s79 = sphi 0, %s78
    %s93 = sphi 0, %s79
    %s97 = sphi 0, %s97
    %s99 = sphi 0, %s97
    %s100 = sphi 0, %s99
    %s114 = sphi 0, %s100
    %s118 = sphi 0, %s118
    %s120 = sphi 0, %s118
    %s121 = sphi 0, %s120
    %s135 = sphi 0, %s121
    %s139 = sphi 0, %s139
    %s141 = sphi 0, %s139
    %s142 = sphi 0, %s141
    %s156 = sphi 0, %s142
    %s160 = sphi 0, %s160
    %s162 = sphi 0, %s160
    %s163 = sphi 0, %s162
    %s177 = sphi 0, %s163
    %s181 = sphi 0, %s181
    %s183 = sphi 0, %s181
    %s184 = sphi 0, %s183
    %s198 = sphi 0, %s184
    %s202 = sphi 0, %s202
    %s204 = sphi 0, %s202
    %s205 = sphi 0, %s204
    %s219 = sphi 0, %s205
    %s225 = sphi 0, %s227
    %s228 = sphi 0, %s225
    %s229 = sphi 0, %s228
    %s245 = sphi 0, %s229
  $region4: #{tpu_custom_call.1} parent=0 // loop_header_branch
    %19 = sbr.rel (%p17) target = $region8
  $region5: #{tpu_custom_call.1} parent=0 // loop_body
    %s21 = ssub.s32 %s16, 1
    %s22 = ssub.s32 %s16, 2
    %s23 = sadd.s32 %s16, 1
    %s24 = ssub.s32 %s16, %s23
    %p25 = scmp.eq.s32.totalorder %s24, 0
    %s27 = sadd.s32 %s26, 1
    %s28 = scalar_select %p25, %s26, %s27
    %p31 = pneg %p25
    %p32 = scmp.eq.s32.totalorder %s16, 1
    %p33 = por %p31, %p32
    %p34 = scmp.ne.s32.totalorder %s26, %s29
    %p35 = scmp.eq.s32.totalorder %s16, 0
    %p36 = por %p34, %p35
    %p37 = scmp.ne.s32.totalorder %s26, %s29
    %p38 = scmp.eq.s32.totalorder %s21, 1
    %p39 = por %p37, %p38
    %p40 = scmp.ne.s32.totalorder %s29, %s30
    %p41 = scmp.eq.s32.totalorder %s21, 0
    %p42 = por %p40, %p41
    %p43 = scmp.ne.s32.totalorder %s29, %s30
    %p44 = scmp.eq.s32.totalorder %s22, 1
    %p45 = por %p43, %p44
    %p47 = scmp.ne.s32.totalorder %s30, %s46
    %p48 = scmp.eq.s32.totalorder %s22, 0
    %p49 = por %p47, %p48
    %s50 = ssub.s32 %s16, %s23
    %p51 = scmp.eq.s32.totalorder %s50, 0
    %s53 = sadd.s32 %s52, 1
    %s54 = scalar_select %p51, %s52, %s53
    %p57 = pneg %p51
    %p58 = scmp.eq.s32.totalorder %s16, 1
    %p59 = por %p57, %p58
    %p60 = scmp.ne.s32.totalorder %s52, %s55
    %p61 = scmp.eq.s32.totalorder %s16, 0
    %p62 = por %p60, %p61
    %p63 = scmp.ne.s32.totalorder %s52, %s55
    %p64 = scmp.eq.s32.totalorder %s21, 1
    %p65 = por %p63, %p64
    %p66 = scmp.ne.s32.totalorder %s55, %s56
    %p67 = scmp.eq.s32.totalorder %s21, 0
    %p68 = por %p66, %p67
    %p69 = scmp.ne.s32.totalorder %s55, %s56
    %p70 = scmp.eq.s32.totalorder %s22, 1
    %p71 = por %p69, %p70
    %p73 = scmp.ne.s32.totalorder %s56, %s72
    %p74 = scmp.eq.s32.totalorder %s22, 0
    %p75 = por %p73, %p74
    %s77 = sadd.s32 %s76, 1
    %p80 = scmp.eq.s32.totalorder %s16, 1
    %p81 = scmp.ne.s32.totalorder %s76, %s78
    %p82 = scmp.eq.s32.totalorder %s16, 0
    %p83 = por %p81, %p82
    %p84 = scmp.ne.s32.totalorder %s76, %s78
    %p85 = scmp.eq.s32.totalorder %s21, 1
    %p86 = por %p84, %p85
    %p87 = scmp.ne.s32.totalorder %s78, %s79
    %p88 = scmp.eq.s32.totalorder %s21, 0
    %p89 = por %p87, %p88
    %p90 = scmp.ne.s32.totalorder %s78, %s79
    %p91 = scmp.eq.s32.totalorder %s22, 1
    %p92 = por %p90, %p91
    %p94 = scmp.ne.s32.totalorder %s79, %s93
    %p95 = scmp.eq.s32.totalorder %s22, 0
    %p96 = por %p94, %p95
    %s98 = sadd.s32 %s97, 1
    %p101 = scmp.eq.s32.totalorder %s16, 1
    %p102 = scmp.ne.s32.totalorder %s97, %s99
    %p103 = scmp.eq.s32.totalorder %s16, 0
    %p104 = por %p102, %p103
    %p105 = scmp.ne.s32.totalorder %s97, %s99
    %p106 = scmp.eq.s32.totalorder %s21, 1
    %p107 = por %p105, %p106
    %p108 = scmp.ne.s32.totalorder %s99, %s100
    %p109 = scmp.eq.s32.totalorder %s21, 0
    %p110 = por %p108, %p109
    %p111 = scmp.ne.s32.totalorder %s99, %s100
    %p112 = scmp.eq.s32.totalorder %s22, 1
    %p113 = por %p111, %p112
    %p115 = scmp.ne.s32.totalorder %s100, %s114
    %p116 = scmp.eq.s32.totalorder %s22, 0
    %p117 = por %p115, %p116
    %s119 = sadd.s32 %s118, 1
    %p122 = scmp.eq.s32.totalorder %s16, 1
    %p123 = scmp.ne.s32.totalorder %s118, %s120
    %p124 = scmp.eq.s32.totalorder %s16, 0
    %p125 = por %p123, %p124
    %p126 = scmp.ne.s32.totalorder %s118, %s120
    %p127 = scmp.eq.s32.totalorder %s21, 1
    %p128 = por %p126, %p127
    %p129 = scmp.ne.s32.totalorder %s120, %s121
    %p130 = scmp.eq.s32.totalorder %s21, 0
    %p131 = por %p129, %p130
    %p132 = scmp.ne.s32.totalorder %s120, %s121
    %p133 = scmp.eq.s32.totalorder %s22, 1
    %p134 = por %p132, %p133
    %p136 = scmp.ne.s32.totalorder %s121, %s135
    %p137 = scmp.eq.s32.totalorder %s22, 0
    %p138 = por %p136, %p137
    %s140 = sadd.s32 %s139, 1
    %p143 = scmp.eq.s32.totalorder %s16, 1
    %p144 = scmp.ne.s32.totalorder %s139, %s141
    %p145 = scmp.eq.s32.totalorder %s16, 0
    %p146 = por %p144, %p145
    %p147 = scmp.ne.s32.totalorder %s139, %s141
    %p148 = scmp.eq.s32.totalorder %s21, 1
    %p149 = por %p147, %p148
    %p150 = scmp.ne.s32.totalorder %s141, %s142
    %p151 = scmp.eq.s32.totalorder %s21, 0
    %p152 = por %p150, %p151
    %p153 = scmp.ne.s32.totalorder %s141, %s142
    %p154 = scmp.eq.s32.totalorder %s22, 1
    %p155 = por %p153, %p154
    %p157 = scmp.ne.s32.totalorder %s142, %s156
    %p158 = scmp.eq.s32.totalorder %s22, 0
    %p159 = por %p157, %p158
    %s161 = sadd.s32 %s160, 1
    %p164 = scmp.eq.s32.totalorder %s16, 1
    %p165 = scmp.ne.s32.totalorder %s160, %s162
    %p166 = scmp.eq.s32.totalorder %s16, 0
    %p167 = por %p165, %p166
    %p168 = scmp.ne.s32.totalorder %s160, %s162
    %p169 = scmp.eq.s32.totalorder %s21, 1
    %p170 = por %p168, %p169
    %p171 = scmp.ne.s32.totalorder %s162, %s163
    %p172 = scmp.eq.s32.totalorder %s21, 0
    %p173 = por %p171, %p172
    %p174 = scmp.ne.s32.totalorder %s162, %s163
    %p175 = scmp.eq.s32.totalorder %s22, 1
    %p176 = por %p174, %p175
    %p178 = scmp.ne.s32.totalorder %s163, %s177
    %p179 = scmp.eq.s32.totalorder %s22, 0
    %p180 = por %p178, %p179
    %s182 = sadd.s32 %s181, 1
    %p185 = scmp.eq.s32.totalorder %s16, 1
    %p186 = scmp.ne.s32.totalorder %s181, %s183
    %p187 = scmp.eq.s32.totalorder %s16, 0
    %p188 = por %p186, %p187
    %p189 = scmp.ne.s32.totalorder %s181, %s183
    %p190 = scmp.eq.s32.totalorder %s21, 1
    %p191 = por %p189, %p190
    %p192 = scmp.ne.s32.totalorder %s183, %s184
    %p193 = scmp.eq.s32.totalorder %s21, 0
    %p194 = por %p192, %p193
    %p195 = scmp.ne.s32.totalorder %s183, %s184
    %p196 = scmp.eq.s32.totalorder %s22, 1
    %p197 = por %p195, %p196
    %p199 = scmp.ne.s32.totalorder %s184, %s198
    %p200 = scmp.eq.s32.totalorder %s22, 0
    %p201 = por %p199, %p200
    %s203 = sadd.s32 %s202, 1
    %p206 = scmp.eq.s32.totalorder %s16, 1
    %p207 = scmp.ne.s32.totalorder %s202, %s204
    %p208 = scmp.eq.s32.totalorder %s16, 0
    %p209 = por %p207, %p208
    %p210 = scmp.ne.s32.totalorder %s202, %s204
    %p211 = scmp.eq.s32.totalorder %s21, 1
    %p212 = por %p210, %p211
    %p213 = scmp.ne.s32.totalorder %s204, %s205
    %p214 = scmp.eq.s32.totalorder %s21, 0
    %p215 = por %p213, %p214
    %p216 = scmp.ne.s32.totalorder %s204, %s205
    %p217 = scmp.eq.s32.totalorder %s22, 1
    %p218 = por %p216, %p217
    %p220 = scmp.ne.s32.totalorder %s205, %s219
    %p221 = scmp.eq.s32.totalorder %s22, 0
    %p222 = por %p220, %p221
    %s223 = ssub.s32 %s16, %s23
    %p224 = scmp.eq.s32.totalorder %s223, 0
    %s226 = sadd.s32 %s225, 1
    %s227 = scalar_select %p224, %s225, %s226
    %p230 = pneg %p224
    %p231 = scmp.eq.s32.totalorder %s16, 1
    %p232 = por %p230, %p231
    %p233 = scmp.ne.s32.totalorder %s225, %s228
    %p234 = scmp.eq.s32.totalorder %s16, 0
    %p235 = por %p233, %p234
    %p236 = scmp.ne.s32.totalorder %s225, %s228
    %p237 = scmp.eq.s32.totalorder %s21, 1
    %p238 = por %p236, %p237
    %p239 = scmp.ne.s32.totalorder %s228, %s229
    %p240 = scmp.eq.s32.totalorder %s21, 0
    %p241 = por %p239, %p240
    %p242 = scmp.ne.s32.totalorder %s228, %s229
    %p243 = scmp.eq.s32.totalorder %s22, 1
    %p244 = por %p242, %p243
    %p246 = scmp.ne.s32.totalorder %s229, %s245
    %p247 = scmp.eq.s32.totalorder %s22, 0
    %p248 = por %p246, %p247
    %p249 = scmp.le.s32.totalorder 1, %s16
    %p250 = scmp.lt.s32.totalorder %s16, 3
    %p251 = pnand %p249, %p250
    %p252 = pneg %p251
    // Predicated region
    $region9: #{tpu_custom_call.1} parent=5 // pred_check
      _
    $region10: #{tpu_custom_call.1} parent=5 // pred_check_branch
      %254 = sbr.rel (%p251) target = $region12
    $region11: #{tpu_custom_call.1} parent=5 // pred_region
      %s255 = ssub.s32 %s16, 1
      // Predicated region
      $region13: #{tpu_custom_call.1} parent=11 // pred_check
        %p256 = pneg %p89
      $region14: #{tpu_custom_call.1} parent=11 // pred_check_branch
        %258 = sbr.rel (%p256) target = $region16
      $region15: #{tpu_custom_call.1} parent=11 // pred_region
        _
      $region16: #{tpu_custom_call.1} parent=11 // pred_fallthru
        _
      // Predicated region
      $region17: #{tpu_custom_call.1} parent=11 // pred_check
        %p259 = pneg %p110
      $region18: #{tpu_custom_call.1} parent=11 // pred_check_branch
        %261 = sbr.rel (%p259) target = $region20
      $region19: #{tpu_custom_call.1} parent=11 // pred_region
        _
      $region20: #{tpu_custom_call.1} parent=11 // pred_fallthru
        _
      // Predicated region
      $region21: #{tpu_custom_call.1} parent=11 // pred_check
        %p262 = pneg %p131
      $region22: #{tpu_custom_call.1} parent=11 // pred_check_branch
        %264 = sbr.rel (%p262) target = $region24
      $region23: #{tpu_custom_call.1} parent=11 // pred_region
        _
      $region24: #{tpu_custom_call.1} parent=11 // pred_fallthru
        _
      // Predicated region
      $region25: #{tpu_custom_call.1} parent=11 // pred_check
        %p265 = pneg %p152
      $region26: #{tpu_custom_call.1} parent=11 // pred_check_branch
        %267 = sbr.rel (%p265) target = $region28
      $region27: #{tpu_custom_call.1} parent=11 // pred_region
        _
      $region28: #{tpu_custom_call.1} parent=11 // pred_fallthru
        _
      // Predicated region
      $region29: #{tpu_custom_call.1} parent=11 // pred_check
        %p268 = pneg %p173
      $region30: #{tpu_custom_call.1} parent=11 // pred_check_branch
        %270 = sbr.rel (%p268) target = $region32
      $region31: #{tpu_custom_call.1} parent=11 // pred_region
        _
      $region32: #{tpu_custom_call.1} parent=11 // pred_fallthru
        _
      // Predicated region
      $region33: #{tpu_custom_call.1} parent=11 // pred_check
        %p271 = pneg %p194
      $region34: #{tpu_custom_call.1} parent=11 // pred_check_branch
        %273 = sbr.rel (%p271) target = $region36
      $region35: #{tpu_custom_call.1} parent=11 // pred_region
        _
      $region36: #{tpu_custom_call.1} parent=11 // pred_fallthru
        _
      // Predicated region
      $region37: #{tpu_custom_call.1} parent=11 // pred_check
        %p274 = pneg %p215
      $region38: #{tpu_custom_call.1} parent=11 // pred_check_branch
        %276 = sbr.rel (%p274) target = $region40
      $region39: #{tpu_custom_call.1} parent=11 // pred_region
        _
      $region40: #{tpu_custom_call.1} parent=11 // pred_fallthru
        _
    $region12: #{tpu_custom_call.1} parent=5 // pred_fallthru
      _
    %p277 = scmp.lt.s32.totalorder %s16, 2
    // Predicated region
    $region41: #{tpu_custom_call.1} parent=5 // pred_check
      %p278 = pneg %p277
    $region42: #{tpu_custom_call.1} parent=5 // pred_check_branch
      %280 = sbr.rel (%p278) target = $region44
    $region43: #{tpu_custom_call.1} parent=5 // pred_region
      // Predicated region
      $region45: #{tpu_custom_call.1} parent=43 // pred_check
        %p281 = pneg %p36
      $region46: #{tpu_custom_call.1} parent=43 // pred_check_branch
        %283 = sbr.rel (%p281) target = $region48
      $region47: #{tpu_custom_call.1} parent=43 // pred_region
        %s284 = smul.u32 32, %s16
        %p285 = scmp.lt.s32.totalorder %s284, 63
        %s286 = scalar_select %p285, %s284, 63
        %s287 = smul.addr %s286, 8
        %s288 = scalar_lea.vmem %s0, %s287
        %s289 = smul.u32 32, %s16
      $region48: #{tpu_custom_call.1} parent=43 // pred_fallthru
        _
      // Predicated region
      $region49: #{tpu_custom_call.1} parent=43 // pred_check
        %p290 = pneg %p62
      $region50: #{tpu_custom_call.1} parent=43 // pred_check_branch
        %292 = sbr.rel (%p290) target = $region52
      $region51: #{tpu_custom_call.1} parent=43 // pred_region
        %s293 = smul.u32 32, %s16
        %p294 = scmp.lt.s32.totalorder %s293, 63
        %s295 = scalar_select %p294, %s293, 63
        %s296 = smul.addr %s295, 8
        %s297 = scalar_lea.vmem %s1, %s296
        %s298 = smul.u32 32, %s16
      $region52: #{tpu_custom_call.1} parent=43 // pred_fallthru
        _
    $region44: #{tpu_custom_call.1} parent=5 // pred_fallthru
      _
    %p299 = scmp.le.s32.totalorder 1, %s16
    %p300 = scmp.lt.s32.totalorder %s16, 3
    %p301 = pnand %p299, %p300
    %p302 = pneg %p301
    // Predicated region
    $region53: #{tpu_custom_call.1} parent=5 // pred_check
      _
    $region54: #{tpu_custom_call.1} parent=5 // pred_check_branch
      %304 = sbr.rel (%p301) target = $region56
    $region55: #{tpu_custom_call.1} parent=5 // pred_region
      %s305 = ssub.s32 %s16, 1
      %s306 = smul.u32 32, %s21
      %p307 = scmp.lt.s32.totalorder %s306, 63
      %s308 = scalar_select %p307, %s306, 63
      %s309 = smul.addr %s308, 8
      %s310 = scalar_lea.vmem %s0, %s309
      %p311 = pneg %p42
      %p312 = pneg %p39
      %s313 = smul.u32 32, %s21
      %p314 = scmp.lt.s32.totalorder %s313, 63
      %s315 = scalar_select %p314, %s313, 63
      %s316 = smul.addr %s315, 8
      %s317 = scalar_lea.vmem %s1, %s316
      %p318 = pneg %p68
      %p319 = pneg %p65
      %p320 = pneg %p89
      %p321 = pneg %p86
      %p322 = pneg %p110
      %p323 = pneg %p107
      %p324 = pneg %p131
      %p325 = pneg %p128
      %p326 = pneg %p152
      %p327 = pneg %p149
      %p328 = pneg %p173
      %p329 = pneg %p170
      %p330 = pneg %p194
      %p331 = pneg %p191
      %p332 = pneg %p215
      %p333 = pneg %p212
      %p334 = pneg %p241
      %p335 = pneg %p238
      %s336 = smul.u32 32, %s21
      %p337 = scmp.lt.s32.totalorder %s336, 63
      %s338 = scalar_select %p337, %s336, 63
      %s339 = smul.addr %s338, 8
      %s340 = scalar_lea.vmem %s9, %s339
      %s341 = smul.u32 32, %s21
      %p342 = scmp.lt.s32.totalorder %s341, 63
      %s343 = scalar_select %p342, %s341, 63
      %s344 = smul.addr %s343, 8
      %s345 = scalar_lea.vmem %s0, %s344
      %s346 = smul.u32 32, %s21
      %s347 = smul.u32 32, %s21
      %p348 = scmp.lt.s32.totalorder %s347, 63
      %s349 = scalar_select %p348, %s347, 63
      %s350 = smul.addr %s349, 8
      %s351 = scalar_lea.vmem %s1, %s350
      %s352 = smul.u32 32, %s21
      %s353 = smul.u32 32, %s21
      %p354 = scmp.lt.s32.totalorder %s353, 63
      %s355 = scalar_select %p354, %s353, 63
      %s356 = smul.addr %s355, 8
      %s357 = scalar_lea.vmem %s9, %s356
      %s358 = smul.u32 32, %s21
      %v359 = vld [vmem:[%s345] sm:$0xff]
      %v360 = vld [vmem:[%s345 + $0x8] sm:$0xff]
      %v361 = vld [vmem:[%s345 + $0x10] sm:$0xff]
      %v362 = vld [vmem:[%s345 + $0x18] sm:$0xff]
      %v363 = vld [vmem:[%s345 + $0x20] sm:$0xff]
      %v364 = vld [vmem:[%s345 + $0x28] sm:$0xff]
      %v365 = vld [vmem:[%s345 + $0x30] sm:$0xff]
      %v366 = vld [vmem:[%s345 + $0x38] sm:$0xff]
      %v367 = vld [vmem:[%s345 + $0x40] sm:$0xff]
      %v368 = vld [vmem:[%s345 + $0x48] sm:$0xff]
      %v369 = vld [vmem:[%s345 + $0x50] sm:$0xff]
      %v370 = vld [vmem:[%s345 + $0x58] sm:$0xff]
      %v371 = vld [vmem:[%s345 + $0x60] sm:$0xff]
      %v372 = vld [vmem:[%s345 + $0x68] sm:$0xff]
      %v373 = vld [vmem:[%s345 + $0x70] sm:$0xff]
      %v374 = vld [vmem:[%s345 + $0x78] sm:$0xff]
      %v375 = vld [vmem:[%s345 + $0x80] sm:$0xff]
      %v376 = vld [vmem:[%s345 + $0x88] sm:$0xff]
      %v377 = vld [vmem:[%s345 + $0x90] sm:$0xff]
      %v378 = vld [vmem:[%s345 + $0x98] sm:$0xff]
      %v379 = vld [vmem:[%s345 + $0xa0] sm:$0xff]
      %v380 = vld [vmem:[%s345 + $0xa8] sm:$0xff]
      %v381 = vld [vmem:[%s345 + $0xb0] sm:$0xff]
      %v382 = vld [vmem:[%s345 + $0xb8] sm:$0xff]
      %v383 = vld [vmem:[%s345 + $0xc0] sm:$0xff]
      %v384 = vld [vmem:[%s345 + $0xc8] sm:$0xff]
      %v385 = vld [vmem:[%s345 + $0xd0] sm:$0xff]
      %v386 = vld [vmem:[%s345 + $0xd8] sm:$0xff]
      %v387 = vld [vmem:[%s345 + $0xe0] sm:$0xff]
      %v388 = vld [vmem:[%s345 + $0xe8] sm:$0xff]
      %v389 = vld [vmem:[%s345 + $0xf0] sm:$0xff]
      %v390 = vld [vmem:[%s345 + $0xf8] sm:$0xff]
      %v391 = vld [vmem:[%s2] sm:$0xff]
      %v392 = vld [vmem:[%s2 + $0x8] sm:$0xff]
      %v393 = vld [vmem:[%s2 + $0x10] sm:$0xf]
      %v394 = vld [vmem:[%s2 + $0x18] sm:$0xf]
      %v395 = vld [vmem:[%s351] sm:$0xff]
      %v396 = vld [vmem:[%s351 + $0x8] sm:$0xff]
      %v397 = vld [vmem:[%s351 + $0x10] sm:$0xff]
      %v398 = vld [vmem:[%s351 + $0x18] sm:$0xff]
      %v399 = vld [vmem:[%s351 + $0x20] sm:$0xff]
      %v400 = vld [vmem:[%s351 + $0x28] sm:$0xff]
      %v401 = vld [vmem:[%s351 + $0x30] sm:$0xff]
      %v402 = vld [vmem:[%s351 + $0x38] sm:$0xff]
      %v403 = vld [vmem:[%s351 + $0x40] sm:$0xff]
      %v404 = vld [vmem:[%s351 + $0x48] sm:$0xff]
      %v405 = vld [vmem:[%s351 + $0x50] sm:$0xff]
      %v406 = vld [vmem:[%s351 + $0x58] sm:$0xff]
      %v407 = vld [vmem:[%s351 + $0x60] sm:$0xff]
      %v408 = vld [vmem:[%s351 + $0x68] sm:$0xff]
      %v409 = vld [vmem:[%s351 + $0x70] sm:$0xff]
      %v410 = vld [vmem:[%s351 + $0x78] sm:$0xff]
      %v411 = vld [vmem:[%s351 + $0x80] sm:$0xff]
      %v412 = vld [vmem:[%s351 + $0x88] sm:$0xff]
      %v413 = vld [vmem:[%s351 + $0x90] sm:$0xff]
      %v414 = vld [vmem:[%s351 + $0x98] sm:$0xff]
      %v415 = vld [vmem:[%s351 + $0xa0] sm:$0xff]
      %v416 = vld [vmem:[%s351 + $0xa8] sm:$0xff]
      %v417 = vld [vmem:[%s351 + $0xb0] sm:$0xff]
      %v418 = vld [vmem:[%s351 + $0xb8] sm:$0xff]
      %v419 = vld [vmem:[%s351 + $0xc0] sm:$0xff]
      %v420 = vld [vmem:[%s351 + $0xc8] sm:$0xff]
      %v421 = vld [vmem:[%s351 + $0xd0] sm:$0xff]
      %v422 = vld [vmem:[%s351 + $0xd8] sm:$0xff]
      %v423 = vld [vmem:[%s351 + $0xe0] sm:$0xff]
      %v424 = vld [vmem:[%s351 + $0xe8] sm:$0xff]
      %v425 = vld [vmem:[%s351 + $0xf0] sm:$0xff]
      %v426 = vld [vmem:[%s351 + $0xf8] sm:$0xff]
      %v427 = vld [vmem:[%s3] sm:$0x1f]
      %v428 = vld [vmem:[%s3 + $0x8] sm:$0x1f]
      %vm429 = vcmask 39936
      %v431 = vsel %vm429, %v395, 0
      %v434 = vsel %vm429, %v396, 0
      %v437 = vsel %vm429, %v397, 0
      %v440 = vsel %vm429, %v398, 0
      %v443 = vsel %vm429, %v399, 0
      %v446 = vsel %vm429, %v400, 0
      %v449 = vsel %vm429, %v401, 0
      %v452 = vsel %vm429, %v402, 0
      %v455 = vsel %vm429, %v403, 0
      %v458 = vsel %vm429, %v404, 0
      %v461 = vsel %vm429, %v405, 0
      %v464 = vsel %vm429, %v406, 0
      %v467 = vsel %vm429, %v407, 0
      %v470 = vsel %vm429, %v408, 0
      %v473 = vsel %vm429, %v409, 0
      %v476 = vsel %vm429, %v410, 0
      %v479 = vsel %vm429, %v411, 0
      %v482 = vsel %vm429, %v412, 0
      %v485 = vsel %vm429, %v413, 0
      %v488 = vsel %vm429, %v414, 0
      %v491 = vsel %vm429, %v415, 0
      %v494 = vsel %vm429, %v416, 0
      %v497 = vsel %vm429, %v417, 0
      %v500 = vsel %vm429, %v418, 0
      %v503 = vsel %vm429, %v419, 0
      %v506 = vsel %vm429, %v420, 0
      %v509 = vsel %vm429, %v421, 0
      %v512 = vsel %vm429, %v422, 0
      %v515 = vsel %vm429, %v423, 0
      %v518 = vsel %vm429, %v424, 0
      %v521 = vsel %vm429, %v425, 0
      %v524 = vsel %vm429, %v426, 0
      %vm526 = vcmask 1044480
      %v528 = vsel %vm526, %v427, 0
      %v531 = vsel %vm526, %v428, 0
      %533 = vmatpush.msra.mxu0 0.0
      %534 = vmatpush.msra.mxu0 0.0
      %535 = vmatpush.msra.mxu0 0.0
      %536 = vmatpush.msra.mxu0 0.0
      %537 = vmatpush.msra.mxu0 0.0
      %538 = vmatpush.msra.mxu0 0.0
      %539 = vmatpush.msra.mxu0 0.0
      %540 = vmatpush.msra.mxu0 0.0
      %541 = vmatpush.msra.mxu0 0.0
      %542 = vmatpush.msra.mxu0 0.0
      %543 = vmatpush.msra.mxu0 0.0
      %544 = vmatpush.msra.mxu0 0.0
      %545 = vmatpush.msra.mxu0 0.0
      %546 = vmatpush.msra.mxu0 0.0
      %547 = vmatpush.msra.mxu0 0.0
      %548 = vmatpush.msra.mxu0 %v528
      %549 = vmatmul.f32.gmra.mxu0 %v431
      %v550 = vpop.f32.mrf.mxu0
      %v551 = vadd.f32 0.0, %v550
      %552 = vmatmul.f32.gmra.mxu0 %v434
      %v553 = vpop.f32.mrf.mxu0
      %v554 = vadd.f32 0.0, %v553
      %555 = vmatmul.f32.gmra.mxu0 %v437
      %v556 = vpop.f32.mrf.mxu0
      %v557 = vadd.f32 0.0, %v556
      %558 = vmatmul.f32.gmra.mxu0 %v440
      %v559 = vpop.f32.mrf.mxu0
      %v560 = vadd.f32 0.0, %v559
      %561 = vmatmul.f32.gmra.mxu0 %v443
      %v562 = vpop.f32.mrf.mxu0
      %v563 = vadd.f32 0.0, %v562
      %564 = vmatmul.f32.gmra.mxu0 %v446
      %v565 = vpop.f32.mrf.mxu0
      %v566 = vadd.f32 0.0, %v565
      %567 = vmatmul.f32.gmra.mxu0 %v449
      %v568 = vpop.f32.mrf.mxu0
      %v569 = vadd.f32 0.0, %v568
      %570 = vmatmul.f32.gmra.mxu0 %v452
      %v571 = vpop.f32.mrf.mxu0
      %v572 = vadd.f32 0.0, %v571
      %573 = vmatmul.f32.gmra.mxu0 %v455
      %v574 = vpop.f32.mrf.mxu0
      %v575 = vadd.f32 0.0, %v574
      %576 = vmatmul.f32.gmra.mxu0 %v458
      %v577 = vpop.f32.mrf.mxu0
      %v578 = vadd.f32 0.0, %v577
      %579 = vmatmul.f32.gmra.mxu0 %v461
      %v580 = vpop.f32.mrf.mxu0
      %v581 = vadd.f32 0.0, %v580
      %582 = vmatmul.f32.gmra.mxu0 %v464
      %v583 = vpop.f32.mrf.mxu0
      %v584 = vadd.f32 0.0, %v583
      %585 = vmatmul.f32.gmra.mxu0 %v467
      %v586 = vpop.f32.mrf.mxu0
      %v587 = vadd.f32 0.0, %v586
      %588 = vmatmul.f32.gmra.mxu0 %v470
      %v589 = vpop.f32.mrf.mxu0
      %v590 = vadd.f32 0.0, %v589
      %591 = vmatmul.f32.gmra.mxu0 %v473
      %v592 = vpop.f32.mrf.mxu0
      %v593 = vadd.f32 0.0, %v592
      %594 = vmatmul.f32.gmra.mxu0 %v476
      %v595 = vpop.f32.mrf.mxu0
      %v596 = vadd.f32 0.0, %v595
      %597 = vmatmul.f32.gmra.mxu0 %v479
      %v598 = vpop.f32.mrf.mxu0
      %v599 = vadd.f32 0.0, %v598
      %600 = vmatmul.f32.gmra.mxu0 %v482
      %v601 = vpop.f32.mrf.mxu0
      %v602 = vadd.f32 0.0, %v601
      %603 = vmatmul.f32.gmra.mxu0 %v485
      %v604 = vpop.f32.mrf.mxu0
      %v605 = vadd.f32 0.0, %v604
      %606 = vmatmul.f32.gmra.mxu0 %v488
      %v607 = vpop.f32.mrf.mxu0
      %v608 = vadd.f32 0.0, %v607
      %609 = vmatmul.f32.gmra.mxu0 %v491
      %v610 = vpop.f32.mrf.mxu0
      %v611 = vadd.f32 0.0, %v610
      %612 = vmatmul.f32.gmra.mxu0 %v494
      %v613 = vpop.f32.mrf.mxu0
      %v614 = vadd.f32 0.0, %v613
      %615 = vmatmul.f32.gmra.mxu0 %v497
      %v616 = vpop.f32.mrf.mxu0
      %v617 = vadd.f32 0.0, %v616
      %618 = vmatmul.f32.gmra.mxu0 %v500
      %v619 = vpop.f32.mrf.mxu0
      %v620 = vadd.f32 0.0, %v619
      %621 = vmatmul.f32.gmra.mxu0 %v503
      %v622 = vpop.f32.mrf.mxu0
      %v623 = vadd.f32 0.0, %v622
      %624 = vmatmul.f32.gmra.mxu0 %v506
      %v625 = vpop.f32.mrf.mxu0
      %v626 = vadd.f32 0.0, %v625
      %627 = vmatmul.f32.gmra.mxu0 %v509
      %v628 = vpop.f32.mrf.mxu0
      %v629 = vadd.f32 0.0, %v628
      %630 = vmatmul.f32.gmra.mxu0 %v512
      %v631 = vpop.f32.mrf.mxu0
      %v632 = vadd.f32 0.0, %v631
      %633 = vmatmul.f32.gmra.mxu0 %v515
      %v634 = vpop.f32.mrf.mxu0
      %v635 = vadd.f32 0.0, %v634
      %636 = vmatmul.f32.gmra.mxu0 %v518
      %v637 = vpop.f32.mrf.mxu0
      %v638 = vadd.f32 0.0, %v637
      %639 = vmatmul.f32.gmra.mxu0 %v521
      %v640 = vpop.f32.mrf.mxu0
      %v641 = vadd.f32 0.0, %v640
      %642 = vmatmul.f32.gmra.mxu0 %v524
      %v643 = vpop.f32.mrf.mxu0
      %v644 = vadd.f32 0.0, %v643
      %645 = vdwg.mxu0
      %646 = vmatpush.msra.mxu0 0.0
      %647 = vmatpush.msra.mxu0 0.0
      %648 = vmatpush.msra.mxu0 0.0
      %649 = vmatpush.msra.mxu0 0.0
      %650 = vmatpush.msra.mxu0 0.0
      %651 = vmatpush.msra.mxu0 0.0
      %652 = vmatpush.msra.mxu0 0.0
      %653 = vmatpush.msra.mxu0 0.0
      %654 = vmatpush.msra.mxu0 0.0
      %655 = vmatpush.msra.mxu0 0.0
      %656 = vmatpush.msra.mxu0 0.0
      %657 = vmatpush.msra.mxu0 0.0
      %658 = vmatpush.msra.mxu0 0.0
      %659 = vmatpush.msra.mxu0 0.0
      %660 = vmatpush.msra.mxu0 0.0
      %661 = vmatpush.msra.mxu0 %v531
      %662 = vmatmul.f32.gmra.mxu0 %v431
      %v663 = vpop.f32.mrf.mxu0
      %v664 = vadd.f32 0.0, %v663
      %665 = vmatmul.f32.gmra.mxu0 %v434
      %v666 = vpop.f32.mrf.mxu0
      %v667 = vadd.f32 0.0, %v666
      %668 = vmatmul.f32.gmra.mxu0 %v437
      %v669 = vpop.f32.mrf.mxu0
      %v670 = vadd.f32 0.0, %v669
      %671 = vmatmul.f32.gmra.mxu0 %v440
      %v672 = vpop.f32.mrf.mxu0
      %v673 = vadd.f32 0.0, %v672
      %674 = vmatmul.f32.gmra.mxu0 %v443
      %v675 = vpop.f32.mrf.mxu0
      %v676 = vadd.f32 0.0, %v675
      %677 = vmatmul.f32.gmra.mxu0 %v446
      %v678 = vpop.f32.mrf.mxu0
      %v679 = vadd.f32 0.0, %v678
      %680 = vmatmul.f32.gmra.mxu0 %v449
      %v681 = vpop.f32.mrf.mxu0
      %v682 = vadd.f32 0.0, %v681
      %683 = vmatmul.f32.gmra.mxu0 %v452
      %v684 = vpop.f32.mrf.mxu0
      %v685 = vadd.f32 0.0, %v684
      %686 = vmatmul.f32.gmra.mxu0 %v455
      %v687 = vpop.f32.mrf.mxu0
      %v688 = vadd.f32 0.0, %v687
      %689 = vmatmul.f32.gmra.mxu0 %v458
      %v690 = vpop.f32.mrf.mxu0
      %v691 = vadd.f32 0.0, %v690
      %692 = vmatmul.f32.gmra.mxu0 %v461
      %v693 = vpop.f32.mrf.mxu0
      %v694 = vadd.f32 0.0, %v693
      %695 = vmatmul.f32.gmra.mxu0 %v464
      %v696 = vpop.f32.mrf.mxu0
      %v697 = vadd.f32 0.0, %v696
      %698 = vmatmul.f32.gmra.mxu0 %v467
      %v699 = vpop.f32.mrf.mxu0
      %v700 = vadd.f32 0.0, %v699
      %701 = vmatmul.f32.gmra.mxu0 %v470
      %v702 = vpop.f32.mrf.mxu0
      %v703 = vadd.f32 0.0, %v702
      %704 = vmatmul.f32.gmra.mxu0 %v473
      %v705 = vpop.f32.mrf.mxu0
      %v706 = vadd.f32 0.0, %v705
      %707 = vmatmul.f32.gmra.mxu0 %v476
      %v708 = vpop.f32.mrf.mxu0
      %v709 = vadd.f32 0.0, %v708
      %710 = vmatmul.f32.gmra.mxu0 %v479
      %v711 = vpop.f32.mrf.mxu0
      %v712 = vadd.f32 0.0, %v711
      %713 = vmatmul.f32.gmra.mxu0 %v482
      %v714 = vpop.f32.mrf.mxu0
      %v715 = vadd.f32 0.0, %v714
      %716 = vmatmul.f32.gmra.mxu0 %v485
      %v717 = vpop.f32.mrf.mxu0
      %v718 = vadd.f32 0.0, %v717
      %719 = vmatmul.f32.gmra.mxu0 %v488
      %v720 = vpop.f32.mrf.mxu0
      %v721 = vadd.f32 0.0, %v720
      %722 = vmatmul.f32.gmra.mxu0 %v491
      %v723 = vpop.f32.mrf.mxu0
      %v724 = vadd.f32 0.0, %v723
      %725 = vmatmul.f32.gmra.mxu0 %v494
      %v726 = vpop.f32.mrf.mxu0
      %v727 = vadd.f32 0.0, %v726
      %728 = vmatmul.f32.gmra.mxu0 %v497
      %v729 = vpop.f32.mrf.mxu0
      %v730 = vadd.f32 0.0, %v729
      %731 = vmatmul.f32.gmra.mxu0 %v500
      %v732 = vpop.f32.mrf.mxu0
      %v733 = vadd.f32 0.0, %v732
      %734 = vmatmul.f32.gmra.mxu0 %v503
      %v735 = vpop.f32.mrf.mxu0
      %v736 = vadd.f32 0.0, %v735
      %737 = vmatmul.f32.gmra.mxu0 %v506
      %v738 = vpop.f32.mrf.mxu0
      %v739 = vadd.f32 0.0, %v738
      %740 = vmatmul.f32.gmra.mxu0 %v509
      %v741 = vpop.f32.mrf.mxu0
      %v742 = vadd.f32 0.0, %v741
      %743 = vmatmul.f32.gmra.mxu0 %v512
      %v744 = vpop.f32.mrf.mxu0
      %v745 = vadd.f32 0.0, %v744
      %746 = vmatmul.f32.gmra.mxu0 %v515
      %v747 = vpop.f32.mrf.mxu0
      %v748 = vadd.f32 0.0, %v747
      %749 = vmatmul.f32.gmra.mxu0 %v518
      %v750 = vpop.f32.mrf.mxu0
      %v751 = vadd.f32 0.0, %v750
      %752 = vmatmul.f32.gmra.mxu0 %v521
      %v753 = vpop.f32.mrf.mxu0
      %v754 = vadd.f32 0.0, %v753
      %755 = vmatmul.f32.gmra.mxu0 %v524
      %v756 = vpop.f32.mrf.mxu0
      %v757 = vadd.f32 0.0, %v756
      %758 = vdwg.mxu0
      %vm759 = vcmask 97280
      %v761 = vsel %vm759, %v359, 0
      %v764 = vsel %vm759, %v360, 0
      %v767 = vsel %vm759, %v361, 0
      %v770 = vsel %vm759, %v362, 0
      %v773 = vsel %vm759, %v363, 0
      %v776 = vsel %vm759, %v364, 0
      %v779 = vsel %vm759, %v365, 0
      %v782 = vsel %vm759, %v366, 0
      %v785 = vsel %vm759, %v367, 0
      %v788 = vsel %vm759, %v368, 0
      %v791 = vsel %vm759, %v369, 0
      %v794 = vsel %vm759, %v370, 0
      %v797 = vsel %vm759, %v371, 0
      %v800 = vsel %vm759, %v372, 0
      %v803 = vsel %vm759, %v373, 0
      %v806 = vsel %vm759, %v374, 0
      %v809 = vsel %vm759, %v375, 0
      %v812 = vsel %vm759, %v376, 0
      %v815 = vsel %vm759, %v377, 0
      %v818 = vsel %vm759, %v378, 0
      %v821 = vsel %vm759, %v379, 0
      %v824 = vsel %vm759, %v380, 0
      %v827 = vsel %vm759, %v381, 0
      %v830 = vsel %vm759, %v382, 0
      %v833 = vsel %vm759, %v383, 0
      %v836 = vsel %vm759, %v384, 0
      %v839 = vsel %vm759, %v385, 0
      %v842 = vsel %vm759, %v386, 0
      %v845 = vsel %vm759, %v387, 0
      %v848 = vsel %vm759, %v388, 0
      %v851 = vsel %vm759, %v389, 0
      %v854 = vsel %vm759, %v390, 0
      %vm856 = vcmask 1043456
      %v858 = vsel %vm856, %v393, 0
      %v861 = vsel %vm856, %v394, 0
      %863 = vmatpush.msra.mxu0 0.0
      %864 = vmatpush.msra.mxu0 0.0
      %865 = vmatpush.msra.mxu0 0.0
      %866 = vmatpush.msra.mxu0 0.0
      %867 = vmatpush.msra.mxu0 0.0
      %868 = vmatpush.msra.mxu0 0.0
      %869 = vmatpush.msra.mxu0 0.0
      %870 = vmatpush.msra.mxu0 0.0
      %871 = vmatpush.msra.mxu0 0.0
      %872 = vmatpush.msra.mxu0 0.0
      %873 = vmatpush.msra.mxu0 0.0
      %874 = vmatpush.msra.mxu0 0.0
      %875 = vmatpush.msra.mxu0 0.0
      %876 = vmatpush.msra.mxu0 0.0
      %877 = vmatpush.msra.mxu0 %v858
      %878 = vmatpush.msra.mxu0 %v391
      %879 = vmatmul.f32.gmra.mxu0 %v761
      %v880 = vpop.f32.mrf.mxu0
      %v881 = vadd.f32 %v551, %v880
      %882 = vmatmul.f32.gmra.mxu0 %v764
      %v883 = vpop.f32.mrf.mxu0
      %v884 = vadd.f32 %v554, %v883
      %885 = vmatmul.f32.gmra.mxu0 %v767
      %v886 = vpop.f32.mrf.mxu0
      %v887 = vadd.f32 %v557, %v886
      %888 = vmatmul.f32.gmra.mxu0 %v770
      %v889 = vpop.f32.mrf.mxu0
      %v890 = vadd.f32 %v560, %v889
      %891 = vmatmul.f32.gmra.mxu0 %v773
      %v892 = vpop.f32.mrf.mxu0
      %v893 = vadd.f32 %v563, %v892
      %894 = vmatmul.f32.gmra.mxu0 %v776
      %v895 = vpop.f32.mrf.mxu0
      %v896 = vadd.f32 %v566, %v895
      %897 = vmatmul.f32.gmra.mxu0 %v779
      %v898 = vpop.f32.mrf.mxu0
      %v899 = vadd.f32 %v569, %v898
      %900 = vmatmul.f32.gmra.mxu0 %v782
      %v901 = vpop.f32.mrf.mxu0
      %v902 = vadd.f32 %v572, %v901
      %903 = vmatmul.f32.gmra.mxu0 %v785
      %v904 = vpop.f32.mrf.mxu0
      %v905 = vadd.f32 %v575, %v904
      %906 = vmatmul.f32.gmra.mxu0 %v788
      %v907 = vpop.f32.mrf.mxu0
      %v908 = vadd.f32 %v578, %v907
      %909 = vmatmul.f32.gmra.mxu0 %v791
      %v910 = vpop.f32.mrf.mxu0
      %v911 = vadd.f32 %v581, %v910
      %912 = vmatmul.f32.gmra.mxu0 %v794
      %v913 = vpop.f32.mrf.mxu0
      %v914 = vadd.f32 %v584, %v913
      %915 = vmatmul.f32.gmra.mxu0 %v797
      %v916 = vpop.f32.mrf.mxu0
      %v917 = vadd.f32 %v587, %v916
      %918 = vmatmul.f32.gmra.mxu0 %v800
      %v919 = vpop.f32.mrf.mxu0
      %v920 = vadd.f32 %v590, %v919
      %921 = vmatmul.f32.gmra.mxu0 %v803
      %v922 = vpop.f32.mrf.mxu0
      %v923 = vadd.f32 %v593, %v922
      %924 = vmatmul.f32.gmra.mxu0 %v806
      %v925 = vpop.f32.mrf.mxu0
      %v926 = vadd.f32 %v596, %v925
      %927 = vmatmul.f32.gmra.mxu0 %v809
      %v928 = vpop.f32.mrf.mxu0
      %v929 = vadd.f32 %v599, %v928
      %930 = vmatmul.f32.gmra.mxu0 %v812
      %v931 = vpop.f32.mrf.mxu0
      %v932 = vadd.f32 %v602, %v931
      %933 = vmatmul.f32.gmra.mxu0 %v815
      %v934 = vpop.f32.mrf.mxu0
      %v935 = vadd.f32 %v605, %v934
      %936 = vmatmul.f32.gmra.mxu0 %v818
      %v937 = vpop.f32.mrf.mxu0
      %v938 = vadd.f32 %v608, %v937
      %939 = vmatmul.f32.gmra.mxu0 %v821
      %v940 = vpop.f32.mrf.mxu0
      %v941 = vadd.f32 %v611, %v940
      %942 = vmatmul.f32.gmra.mxu0 %v824
      %v943 = vpop.f32.mrf.mxu0
      %v944 = vadd.f32 %v614, %v943
      %945 = vmatmul.f32.gmra.mxu0 %v827
      %v946 = vpop.f32.mrf.mxu0
      %v947 = vadd.f32 %v617, %v946
      %948 = vmatmul.f32.gmra.mxu0 %v830
      %v949 = vpop.f32.mrf.mxu0
      %v950 = vadd.f32 %v620, %v949
      %951 = vmatmul.f32.gmra.mxu0 %v833
      %v952 = vpop.f32.mrf.mxu0
      %v953 = vadd.f32 %v623, %v952
      %954 = vmatmul.f32.gmra.mxu0 %v836
      %v955 = vpop.f32.mrf.mxu0
      %v956 = vadd.f32 %v626, %v955
      %957 = vmatmul.f32.gmra.mxu0 %v839
      %v958 = vpop.f32.mrf.mxu0
      %v959 = vadd.f32 %v629, %v958
      %960 = vmatmul.f32.gmra.mxu0 %v842
      %v961 = vpop.f32.mrf.mxu0
      %v962 = vadd.f32 %v632, %v961
      %963 = vmatmul.f32.gmra.mxu0 %v845
      %v964 = vpop.f32.mrf.mxu0
      %v965 = vadd.f32 %v635, %v964
      %966 = vmatmul.f32.gmra.mxu0 %v848
      %v967 = vpop.f32.mrf.mxu0
      %v968 = vadd.f32 %v638, %v967
      %969 = vmatmul.f32.gmra.mxu0 %v851
      %v970 = vpop.f32.mrf.mxu0
      %v971 = vadd.f32 %v641, %v970
      %972 = vmatmul.f32.gmra.mxu0 %v854
      %v973 = vpop.f32.mrf.mxu0
      %v974 = vadd.f32 %v644, %v973
      %975 = vdwg.mxu0
      %976 = vmatpush.msra.mxu0 0.0
      %977 = vmatpush.msra.mxu0 0.0
      %978 = vmatpush.msra.mxu0 0.0
      %979 = vmatpush.msra.mxu0 0.0
      %980 = vmatpush.msra.mxu0 0.0
      %981 = vmatpush.msra.mxu0 0.0
      %982 = vmatpush.msra.mxu0 0.0
      %983 = vmatpush.msra.mxu0 0.0
      %984 = vmatpush.msra.mxu0 0.0
      %985 = vmatpush.msra.mxu0 0.0
      %986 = vmatpush.msra.mxu0 0.0
      %987 = vmatpush.msra.mxu0 0.0
      %988 = vmatpush.msra.mxu0 0.0
      %989 = vmatpush.msra.mxu0 0.0
      %990 = vmatpush.msra.mxu0 %v861
      %991 = vmatpush.msra.mxu0 %v392
      %992 = vmatmul.f32.gmra.mxu0 %v761
      %v993 = vpop.f32.mrf.mxu0
      %v994 = vadd.f32 %v664, %v993
      %995 = vmatmul.f32.gmra.mxu0 %v764
      %v996 = vpop.f32.mrf.mxu0
      %v997 = vadd.f32 %v667, %v996
      %998 = vmatmul.f32.gmra.mxu0 %v767
      %v999 = vpop.f32.mrf.mxu0
      %v1000 = vadd.f32 %v670, %v999
      %1001 = vmatmul.f32.gmra.mxu0 %v770
      %v1002 = vpop.f32.mrf.mxu0
      %v1003 = vadd.f32 %v673, %v1002
      %1004 = vmatmul.f32.gmra.mxu0 %v773
      %v1005 = vpop.f32.mrf.mxu0
      %v1006 = vadd.f32 %v676, %v1005
      %1007 = vmatmul.f32.gmra.mxu0 %v776
      %v1008 = vpop.f32.mrf.mxu0
      %v1009 = vadd.f32 %v679, %v1008
      %1010 = vmatmul.f32.gmra.mxu0 %v779
      %v1011 = vpop.f32.mrf.mxu0
      %v1012 = vadd.f32 %v682, %v1011
      %1013 = vmatmul.f32.gmra.mxu0 %v782
      %v1014 = vpop.f32.mrf.mxu0
      %v1015 = vadd.f32 %v685, %v1014
      %1016 = vmatmul.f32.gmra.mxu0 %v785
      %v1017 = vpop.f32.mrf.mxu0
      %v1018 = vadd.f32 %v688, %v1017
      %1019 = vmatmul.f32.gmra.mxu0 %v788
      %v1020 = vpop.f32.mrf.mxu0
      %v1021 = vadd.f32 %v691, %v1020
      %1022 = vmatmul.f32.gmra.mxu0 %v791
      %v1023 = vpop.f32.mrf.mxu0
      %v1024 = vadd.f32 %v694, %v1023
      %1025 = vmatmul.f32.gmra.mxu0 %v794
      %v1026 = vpop.f32.mrf.mxu0
      %v1027 = vadd.f32 %v697, %v1026
      %1028 = vmatmul.f32.gmra.mxu0 %v797
      %v1029 = vpop.f32.mrf.mxu0
      %v1030 = vadd.f32 %v700, %v1029
      %1031 = vmatmul.f32.gmra.mxu0 %v800
      %v1032 = vpop.f32.mrf.mxu0
      %v1033 = vadd.f32 %v703, %v1032
      %1034 = vmatmul.f32.gmra.mxu0 %v803
      %v1035 = vpop.f32.mrf.mxu0
      %v1036 = vadd.f32 %v706, %v1035
      %1037 = vmatmul.f32.gmra.mxu0 %v806
      %v1038 = vpop.f32.mrf.mxu0
      %v1039 = vadd.f32 %v709, %v1038
      %1040 = vmatmul.f32.gmra.mxu0 %v809
      %v1041 = vpop.f32.mrf.mxu0
      %v1042 = vadd.f32 %v712, %v1041
      %1043 = vmatmul.f32.gmra.mxu0 %v812
      %v1044 = vpop.f32.mrf.mxu0
      %v1045 = vadd.f32 %v715, %v1044
      %1046 = vmatmul.f32.gmra.mxu0 %v815
      %v1047 = vpop.f32.mrf.mxu0
      %v1048 = vadd.f32 %v718, %v1047
      %1049 = vmatmul.f32.gmra.mxu0 %v818
      %v1050 = vpop.f32.mrf.mxu0
      %v1051 = vadd.f32 %v721, %v1050
      %1052 = vmatmul.f32.gmra.mxu0 %v821
      %v1053 = vpop.f32.mrf.mxu0
      %v1054 = vadd.f32 %v724, %v1053
      %1055 = vmatmul.f32.gmra.mxu0 %v824
      %v1056 = vpop.f32.mrf.mxu0
      %v1057 = vadd.f32 %v727, %v1056
      %1058 = vmatmul.f32.gmra.mxu0 %v827
      %v1059 = vpop.f32.mrf.mxu0
      %v1060 = vadd.f32 %v730, %v1059
      %1061 = vmatmul.f32.gmra.mxu0 %v830
      %v1062 = vpop.f32.mrf.mxu0
      %v1063 = vadd.f32 %v733, %v1062
      %1064 = vmatmul.f32.gmra.mxu0 %v833
      %v1065 = vpop.f32.mrf.mxu0
      %v1066 = vadd.f32 %v736, %v1065
      %1067 = vmatmul.f32.gmra.mxu0 %v836
      %v1068 = vpop.f32.mrf.mxu0
      %v1069 = vadd.f32 %v739, %v1068
      %1070 = vmatmul.f32.gmra.mxu0 %v839
      %v1071 = vpop.f32.mrf.mxu0
      %v1072 = vadd.f32 %v742, %v1071
      %1073 = vmatmul.f32.gmra.mxu0 %v842
      %v1074 = vpop.f32.mrf.mxu0
      %v1075 = vadd.f32 %v745, %v1074
      %1076 = vmatmul.f32.gmra.mxu0 %v845
      %v1077 = vpop.f32.mrf.mxu0
      %v1078 = vadd.f32 %v748, %v1077
      %1079 = vmatmul.f32.gmra.mxu0 %v848
      %v1080 = vpop.f32.mrf.mxu0
      %v1081 = vadd.f32 %v751, %v1080
      %1082 = vmatmul.f32.gmra.mxu0 %v851
      %v1083 = vpop.f32.mrf.mxu0
      %v1084 = vadd.f32 %v754, %v1083
      %1085 = vmatmul.f32.gmra.mxu0 %v854
      %v1086 = vpop.f32.mrf.mxu0
      %v1087 = vadd.f32 %v757, %v1086
      %1088 = vdwg.mxu0
      %v1089 = vld [vmem:[%s4] sm:$0x3]
      %v1091 = vperm.slane %v1089, 0
      %v1092 = vperm.slane %v1089, 1
      %v1095 = vadd.f32 %v881, %v1091
      %v1096 = vadd.f32 %v994, %v1092
      %v1097 = vadd.f32 %v884, %v1091
      %v1098 = vadd.f32 %v997, %v1092
      %v1099 = vadd.f32 %v887, %v1091
      %v1100 = vadd.f32 %v1000, %v1092
      %v1101 = vadd.f32 %v890, %v1091
      %v1102 = vadd.f32 %v1003, %v1092
      %v1103 = vadd.f32 %v893, %v1091
      %v1104 = vadd.f32 %v1006, %v1092
      %v1105 = vadd.f32 %v896, %v1091
      %v1106 = vadd.f32 %v1009, %v1092
      %v1107 = vadd.f32 %v899, %v1091
      %v1108 = vadd.f32 %v1012, %v1092
      %v1109 = vadd.f32 %v902, %v1091
      %v1110 = vadd.f32 %v1015, %v1092
      %v1111 = vadd.f32 %v905, %v1091
      %v1112 = vadd.f32 %v1018, %v1092
      %v1113 = vadd.f32 %v908, %v1091
      %v1114 = vadd.f32 %v1021, %v1092
      %v1115 = vadd.f32 %v911, %v1091
      %v1116 = vadd.f32 %v1024, %v1092
      %v1117 = vadd.f32 %v914, %v1091
      %v1118 = vadd.f32 %v1027, %v1092
      %v1119 = vadd.f32 %v917, %v1091
      %v1120 = vadd.f32 %v1030, %v1092
      %v1121 = vadd.f32 %v920, %v1091
      %v1122 = vadd.f32 %v1033, %v1092
      %v1123 = vadd.f32 %v923, %v1091
      %v1124 = vadd.f32 %v1036, %v1092
      %v1125 = vadd.f32 %v926, %v1091
      %v1126 = vadd.f32 %v1039, %v1092
      %v1127 = vadd.f32 %v929, %v1091
      %v1128 = vadd.f32 %v1042, %v1092
      %v1129 = vadd.f32 %v932, %v1091
      %v1130 = vadd.f32 %v1045, %v1092
      %v1131 = vadd.f32 %v935, %v1091
      %v1132 = vadd.f32 %v1048, %v1092
      %v1133 = vadd.f32 %v938, %v1091
      %v1134 = vadd.f32 %v1051, %v1092
      %v1135 = vadd.f32 %v941, %v1091
      %v1136 = vadd.f32 %v1054, %v1092
      %v1137 = vadd.f32 %v944, %v1091
      %v1138 = vadd.f32 %v1057, %v1092
      %v1139 = vadd.f32 %v947, %v1091
      %v1140 = vadd.f32 %v1060, %v1092
      %v1141 = vadd.f32 %v950, %v1091
      %v1142 = vadd.f32 %v1063, %v1092
      %v1143 = vadd.f32 %v953, %v1091
      %v1144 = vadd.f32 %v1066, %v1092
      %v1145 = vadd.f32 %v956, %v1091
      %v1146 = vadd.f32 %v1069, %v1092
      %v1147 = vadd.f32 %v959, %v1091
      %v1148 = vadd.f32 %v1072, %v1092
      %v1149 = vadd.f32 %v962, %v1091
      %v1150 = vadd.f32 %v1075, %v1092
      %v1151 = vadd.f32 %v965, %v1091
      %v1152 = vadd.f32 %v1078, %v1092
      %v1153 = vadd.f32 %v968, %v1091
      %v1154 = vadd.f32 %v1081, %v1092
      %v1155 = vadd.f32 %v971, %v1091
      %v1156 = vadd.f32 %v1084, %v1092
      %v1157 = vadd.f32 %v974, %v1091
      %v1158 = vadd.f32 %v1087, %v1092
      %vm1159 = vcmp.gt.f32.partialorder %v1095, 0.0
      %vm1160 = vcmp.gt.f32.partialorder %v1096, 0.0
      %vm1161 = vcmp.gt.f32.partialorder %v1097, 0.0
      %vm1162 = vcmp.gt.f32.partialorder %v1098, 0.0
      %vm1163 = vcmp.gt.f32.partialorder %v1099, 0.0
      %vm1164 = vcmp.gt.f32.partialorder %v1100, 0.0
      %vm1165 = vcmp.gt.f32.partialorder %v1101, 0.0
      %vm1166 = vcmp.gt.f32.partialorder %v1102, 0.0
      %vm1167 = vcmp.gt.f32.partialorder %v1103, 0.0
      %vm1168 = vcmp.gt.f32.partialorder %v1104, 0.0
      %vm1169 = vcmp.gt.f32.partialorder %v1105, 0.0
      %vm1170 = vcmp.gt.f32.partialorder %v1106, 0.0
      %vm1171 = vcmp.gt.f32.partialorder %v1107, 0.0
      %vm1172 = vcmp.gt.f32.partialorder %v1108, 0.0
      %vm1173 = vcmp.gt.f32.partialorder %v1109, 0.0
      %vm1174 = vcmp.gt.f32.partialorder %v1110, 0.0
      %vm1175 = vcmp.gt.f32.partialorder %v1111, 0.0
      %vm1176 = vcmp.gt.f32.partialorder %v1112, 0.0
      %vm1177 = vcmp.gt.f32.partialorder %v1113, 0.0
      %vm1178 = vcmp.gt.f32.partialorder %v1114, 0.0
      %vm1179 = vcmp.gt.f32.partialorder %v1115, 0.0
      %vm1180 = vcmp.gt.f32.partialorder %v1116, 0.0
      %vm1181 = vcmp.gt.f32.partialorder %v1117, 0.0
      %vm1182 = vcmp.gt.f32.partialorder %v1118, 0.0
      %vm1183 = vcmp.gt.f32.partialorder %v1119, 0.0
      %vm1184 = vcmp.gt.f32.partialorder %v1120, 0.0
      %vm1185 = vcmp.gt.f32.partialorder %v1121, 0.0
      %vm1186 = vcmp.gt.f32.partialorder %v1122, 0.0
      %vm1187 = vcmp.gt.f32.partialorder %v1123, 0.0
      %vm1188 = vcmp.gt.f32.partialorder %v1124, 0.0
      %vm1189 = vcmp.gt.f32.partialorder %v1125, 0.0
      %vm1190 = vcmp.gt.f32.partialorder %v1126, 0.0
      %vm1191 = vcmp.gt.f32.partialorder %v1127, 0.0
      %vm1192 = vcmp.gt.f32.partialorder %v1128, 0.0
      %vm1193 = vcmp.gt.f32.partialorder %v1129, 0.0
      %vm1194 = vcmp.gt.f32.partialorder %v1130, 0.0
      %vm1195 = vcmp.gt.f32.partialorder %v1131, 0.0
      %vm1196 = vcmp.gt.f32.partialorder %v1132, 0.0
      %vm1197 = vcmp.gt.f32.partialorder %v1133, 0.0
      %vm1198 = vcmp.gt.f32.partialorder %v1134, 0.0
      %vm1199 = vcmp.gt.f32.partialorder %v1135, 0.0
      %vm1200 = vcmp.gt.f32.partialorder %v1136, 0.0
      %vm1201 = vcmp.gt.f32.partialorder %v1137, 0.0
      %vm1202 = vcmp.gt.f32.partialorder %v1138, 0.0
      %vm1203 = vcmp.gt.f32.partialorder %v1139, 0.0
      %vm1204 = vcmp.gt.f32.partialorder %v1140, 0.0
      %vm1205 = vcmp.gt.f32.partialorder %v1141, 0.0
      %vm1206 = vcmp.gt.f32.partialorder %v1142, 0.0
      %vm1207 = vcmp.gt.f32.partialorder %v1143, 0.0
      %vm1208 = vcmp.gt.f32.partialorder %v1144, 0.0
      %vm1209 = vcmp.gt.f32.partialorder %v1145, 0.0
      %vm1210 = vcmp.gt.f32.partialorder %v1146, 0.0
      %vm1211 = vcmp.gt.f32.partialorder %v1147, 0.0
      %vm1212 = vcmp.gt.f32.partialorder %v1148, 0.0
      %vm1213 = vcmp.gt.f32.partialorder %v1149, 0.0
      %vm1214 = vcmp.gt.f32.partialorder %v1150, 0.0
      %vm1215 = vcmp.gt.f32.partialorder %v1151, 0.0
      %vm1216 = vcmp.gt.f32.partialorder %v1152, 0.0
      %vm1217 = vcmp.gt.f32.partialorder %v1153, 0.0
      %vm1218 = vcmp.gt.f32.partialorder %v1154, 0.0
      %vm1219 = vcmp.gt.f32.partialorder %v1155, 0.0
      %vm1220 = vcmp.gt.f32.partialorder %v1156, 0.0
      %vm1221 = vcmp.gt.f32.partialorder %v1157, 0.0
      %vm1222 = vcmp.gt.f32.partialorder %v1158, 0.0
      %v1223 = vmul.f32 %v1095, 0.2
      %v1224 = vmul.f32 %v1096, 0.2
      %v1225 = vmul.f32 %v1097, 0.2
      %v1226 = vmul.f32 %v1098, 0.2
      %v1227 = vmul.f32 %v1099, 0.2
      %v1228 = vmul.f32 %v1100, 0.2
      %v1229 = vmul.f32 %v1101, 0.2
      %v1230 = vmul.f32 %v1102, 0.2
      %v1231 = vmul.f32 %v1103, 0.2
      %v1232 = vmul.f32 %v1104, 0.2
      %v1233 = vmul.f32 %v1105, 0.2
      %v1234 = vmul.f32 %v1106, 0.2
      %v1235 = vmul.f32 %v1107, 0.2
      %v1236 = vmul.f32 %v1108, 0.2
      %v1237 = vmul.f32 %v1109, 0.2
      %v1238 = vmul.f32 %v1110, 0.2
      %v1239 = vmul.f32 %v1111, 0.2
      %v1240 = vmul.f32 %v1112, 0.2
      %v1241 = vmul.f32 %v1113, 0.2
      %v1242 = vmul.f32 %v1114, 0.2
      %v1243 = vmul.f32 %v1115, 0.2
      %v1244 = vmul.f32 %v1116, 0.2
      %v1245 = vmul.f32 %v1117, 0.2
      %v1246 = vmul.f32 %v1118, 0.2
      %v1247 = vmul.f32 %v1119, 0.2
      %v1248 = vmul.f32 %v1120, 0.2
      %v1249 = vmul.f32 %v1121, 0.2
      %v1250 = vmul.f32 %v1122, 0.2
      %v1251 = vmul.f32 %v1123, 0.2
      %v1252 = vmul.f32 %v1124, 0.2
      %v1253 = vmul.f32 %v1125, 0.2
      %v1254 = vmul.f32 %v1126, 0.2
      %v1255 = vmul.f32 %v1127, 0.2
      %v1256 = vmul.f32 %v1128, 0.2
      %v1257 = vmul.f32 %v1129, 0.2
      %v1258 = vmul.f32 %v1130, 0.2
      %v1259 = vmul.f32 %v1131, 0.2
      %v1260 = vmul.f32 %v1132, 0.2
      %v1261 = vmul.f32 %v1133, 0.2
      %v1262 = vmul.f32 %v1134, 0.2
      %v1263 = vmul.f32 %v1135, 0.2
      %v1264 = vmul.f32 %v1136, 0.2
      %v1265 = vmul.f32 %v1137, 0.2
      %v1266 = vmul.f32 %v1138, 0.2
      %v1267 = vmul.f32 %v1139, 0.2
      %v1268 = vmul.f32 %v1140, 0.2
      %v1269 = vmul.f32 %v1141, 0.2
      %v1270 = vmul.f32 %v1142, 0.2
      %v1271 = vmul.f32 %v1143, 0.2
      %v1272 = vmul.f32 %v1144, 0.2
      %v1273 = vmul.f32 %v1145, 0.2
      %v1274 = vmul.f32 %v1146, 0.2
      %v1275 = vmul.f32 %v1147, 0.2
      %v1276 = vmul.f32 %v1148, 0.2
      %v1277 = vmul.f32 %v1149, 0.2
      %v1278 = vmul.f32 %v1150, 0.2
      %v1279 = vmul.f32 %v1151, 0.2
      %v1280 = vmul.f32 %v1152, 0.2
      %v1281 = vmul.f32 %v1153, 0.2
      %v1282 = vmul.f32 %v1154, 0.2
      %v1283 = vmul.f32 %v1155, 0.2
      %v1284 = vmul.f32 %v1156, 0.2
      %v1285 = vmul.f32 %v1157, 0.2
      %v1286 = vmul.f32 %v1158, 0.2
      %v1287 = vsel %vm1159, %v1095, %v1223
      %v1288 = vsel %vm1160, %v1096, %v1224
      %v1289 = vsel %vm1161, %v1097, %v1225
      %v1290 = vsel %vm1162, %v1098, %v1226
      %v1291 = vsel %vm1163, %v1099, %v1227
      %v1292 = vsel %vm1164, %v1100, %v1228
      %v1293 = vsel %vm1165, %v1101, %v1229
      %v1294 = vsel %vm1166, %v1102, %v1230
      %v1295 = vsel %vm1167, %v1103, %v1231
      %v1296 = vsel %vm1168, %v1104, %v1232
      %v1297 = vsel %vm1169, %v1105, %v1233
      %v1298 = vsel %vm1170, %v1106, %v1234
      %v1299 = vsel %vm1171, %v1107, %v1235
      %v1300 = vsel %vm1172, %v1108, %v1236
      %v1301 = vsel %vm1173, %v1109, %v1237
      %v1302 = vsel %vm1174, %v1110, %v1238
      %v1303 = vsel %vm1175, %v1111, %v1239
      %v1304 = vsel %vm1176, %v1112, %v1240
      %v1305 = vsel %vm1177, %v1113, %v1241
      %v1306 = vsel %vm1178, %v1114, %v1242
      %v1307 = vsel %vm1179, %v1115, %v1243
      %v1308 = vsel %vm1180, %v1116, %v1244
      %v1309 = vsel %vm1181, %v1117, %v1245
      %v1310 = vsel %vm1182, %v1118, %v1246
      %v1311 = vsel %vm1183, %v1119, %v1247
      %v1312 = vsel %vm1184, %v1120, %v1248
      %v1313 = vsel %vm1185, %v1121, %v1249
      %v1314 = vsel %vm1186, %v1122, %v1250
      %v1315 = vsel %vm1187, %v1123, %v1251
      %v1316 = vsel %vm1188, %v1124, %v1252
      %v1317 = vsel %vm1189, %v1125, %v1253
      %v1318 = vsel %vm1190, %v1126, %v1254
      %v1319 = vsel %vm1191, %v1127, %v1255
      %v1320 = vsel %vm1192, %v1128, %v1256
      %v1321 = vsel %vm1193, %v1129, %v1257
      %v1322 = vsel %vm1194, %v1130, %v1258
      %v1323 = vsel %vm1195, %v1131, %v1259
      %v1324 = vsel %vm1196, %v1132, %v1260
      %v1325 = vsel %vm1197, %v1133, %v1261
      %v1326 = vsel %vm1198, %v1134, %v1262
      %v1327 = vsel %vm1199, %v1135, %v1263
      %v1328 = vsel %vm1200, %v1136, %v1264
      %v1329 = vsel %vm1201, %v1137, %v1265
      %v1330 = vsel %vm1202, %v1138, %v1266
      %v1331 = vsel %vm1203, %v1139, %v1267
      %v1332 = vsel %vm1204, %v1140, %v1268
      %v1333 = vsel %vm1205, %v1141, %v1269
      %v1334 = vsel %vm1206, %v1142, %v1270
      %v1335 = vsel %vm1207, %v1143, %v1271
      %v1336 = vsel %vm1208, %v1144, %v1272
      %v1337 = vsel %vm1209, %v1145, %v1273
      %v1338 = vsel %vm1210, %v1146, %v1274
      %v1339 = vsel %vm1211, %v1147, %v1275
      %v1340 = vsel %vm1212, %v1148, %v1276
      %v1341 = vsel %vm1213, %v1149, %v1277
      %v1342 = vsel %vm1214, %v1150, %v1278
      %v1343 = vsel %vm1215, %v1151, %v1279
      %v1344 = vsel %vm1216, %v1152, %v1280
      %v1345 = vsel %vm1217, %v1153, %v1281
      %v1346 = vsel %vm1218, %v1154, %v1282
      %v1347 = vsel %vm1219, %v1155, %v1283
      %v1348 = vsel %vm1220, %v1156, %v1284
      %v1349 = vsel %vm1221, %v1157, %v1285
      %v1350 = vsel %vm1222, %v1158, %v1286
      %v1351 = vld [vmem:[%s5] sm:$0xff]
      %v1352 = vld [vmem:[%s5 + $0x8] sm:$0xff]
      %v1353 = vld [vmem:[%s5 + $0x10] sm:$0xff]
      %v1354 = vld [vmem:[%s5 + $0x18] sm:$0xff]
      %v1355 = vld [vmem:[%s5 + $0x20] sm:$0xff]
      %v1356 = vld [vmem:[%s5 + $0x28] sm:$0xff]
      %v1357 = vld [vmem:[%s5 + $0x30] sm:$0xff]
      %v1358 = vld [vmem:[%s5 + $0x38] sm:$0xff]
      %v1359 = vld [vmem:[%s5 + $0x40] sm:$0xff]
      %v1360 = vld [vmem:[%s5 + $0x48] sm:$0xff]
      %v1361 = vld [vmem:[%s5 + $0x50] sm:$0xff]
      %v1362 = vld [vmem:[%s5 + $0x58] sm:$0xff]
      %v1363 = vld [vmem:[%s5 + $0x60] sm:$0xff]
      %v1364 = vld [vmem:[%s5 + $0x68] sm:$0xff]
      %v1365 = vld [vmem:[%s5 + $0x70] sm:$0xff]
      %v1366 = vld [vmem:[%s5 + $0x78] sm:$0xff]
      %v1367 = vld [vmem:[%s5 + $0x80] sm:$0xff]
      %v1368 = vld [vmem:[%s5 + $0x88] sm:$0xff]
      %v1369 = vld [vmem:[%s5 + $0x90] sm:$0xff]
      %v1370 = vld [vmem:[%s5 + $0x98] sm:$0xff]
      %v1371 = vld [vmem:[%s5 + $0xa0] sm:$0xff]
      %v1372 = vld [vmem:[%s5 + $0xa8] sm:$0xff]
      %v1373 = vld [vmem:[%s5 + $0xb0] sm:$0xff]
      %v1374 = vld [vmem:[%s5 + $0xb8] sm:$0xff]
      %v1375 = vld [vmem:[%s5 + $0xc0] sm:$0xff]
      %v1376 = vld [vmem:[%s5 + $0xc8] sm:$0xff]
      %v1377 = vld [vmem:[%s5 + $0xd0] sm:$0xff]
      %v1378 = vld [vmem:[%s5 + $0xd8] sm:$0xff]
      %v1379 = vld [vmem:[%s5 + $0xe0] sm:$0xff]
      %v1380 = vld [vmem:[%s5 + $0xe8] sm:$0xff]
      %v1381 = vld [vmem:[%s5 + $0xf0] sm:$0xff]
      %v1382 = vld [vmem:[%s5 + $0xf8] sm:$0xff]
      %v1383 = vld [vmem:[%s6] sm:$0x1]
      %v1385 = vperm.slane %v1383, 0
      %1387 = vmatpush.msra.mxu0 %v1366
      %1388 = vmatpush.msra.mxu0 %v1365
      %1389 = vmatpush.msra.mxu0 %v1364
      %1390 = vmatpush.msra.mxu0 %v1363
      %1391 = vmatpush.msra.mxu0 %v1362
      %1392 = vmatpush.msra.mxu0 %v1361
      %1393 = vmatpush.msra.mxu0 %v1360
      %1394 = vmatpush.msra.mxu0 %v1359
      %1395 = vmatpush.msra.mxu0 %v1358
      %1396 = vmatpush.msra.mxu0 %v1357
      %1397 = vmatpush.msra.mxu0 %v1356
      %1398 = vmatpush.msra.mxu0 %v1355
      %1399 = vmatpush.msra.mxu0 %v1354
      %1400 = vmatpush.msra.mxu0 %v1353
      %1401 = vmatpush.msra.mxu0 %v1352
      %1402 = vmatpush.msra.mxu0 %v1351
      %1403 = vmatmul.f32.gmra.mxu0 %v1287
      %v1404 = vpop.f32.mrf.mxu0
      %v1405 = vadd.f32 %v1385, %v1404
      %1406 = vmatmul.f32.gmra.mxu0 %v1289
      %v1407 = vpop.f32.mrf.mxu0
      %v1408 = vadd.f32 %v1385, %v1407
      %1409 = vmatmul.f32.gmra.mxu0 %v1291
      %v1410 = vpop.f32.mrf.mxu0
      %v1411 = vadd.f32 %v1385, %v1410
      %1412 = vmatmul.f32.gmra.mxu0 %v1293
      %v1413 = vpop.f32.mrf.mxu0
      %v1414 = vadd.f32 %v1385, %v1413
      %1415 = vmatmul.f32.gmra.mxu0 %v1295
      %v1416 = vpop.f32.mrf.mxu0
      %v1417 = vadd.f32 %v1385, %v1416
      %1418 = vmatmul.f32.gmra.mxu0 %v1297
      %v1419 = vpop.f32.mrf.mxu0
      %v1420 = vadd.f32 %v1385, %v1419
      %1421 = vmatmul.f32.gmra.mxu0 %v1299
      %v1422 = vpop.f32.mrf.mxu0
      %v1423 = vadd.f32 %v1385, %v1422
      %1424 = vmatmul.f32.gmra.mxu0 %v1301
      %v1425 = vpop.f32.mrf.mxu0
      %v1426 = vadd.f32 %v1385, %v1425
      %1427 = vmatmul.f32.gmra.mxu0 %v1303
      %v1428 = vpop.f32.mrf.mxu0
      %v1429 = vadd.f32 %v1385, %v1428
      %1430 = vmatmul.f32.gmra.mxu0 %v1305
      %v1431 = vpop.f32.mrf.mxu0
      %v1432 = vadd.f32 %v1385, %v1431
      %1433 = vmatmul.f32.gmra.mxu0 %v1307
      %v1434 = vpop.f32.mrf.mxu0
      %v1435 = vadd.f32 %v1385, %v1434
      %1436 = vmatmul.f32.gmra.mxu0 %v1309
      %v1437 = vpop.f32.mrf.mxu0
      %v1438 = vadd.f32 %v1385, %v1437
      %1439 = vmatmul.f32.gmra.mxu0 %v1311
      %v1440 = vpop.f32.mrf.mxu0
      %v1441 = vadd.f32 %v1385, %v1440
      %1442 = vmatmul.f32.gmra.mxu0 %v1313
      %v1443 = vpop.f32.mrf.mxu0
      %v1444 = vadd.f32 %v1385, %v1443
      %1445 = vmatmul.f32.gmra.mxu0 %v1315
      %v1446 = vpop.f32.mrf.mxu0
      %v1447 = vadd.f32 %v1385, %v1446
      %1448 = vmatmul.f32.gmra.mxu0 %v1317
      %v1449 = vpop.f32.mrf.mxu0
      %v1450 = vadd.f32 %v1385, %v1449
      %1451 = vmatmul.f32.gmra.mxu0 %v1319
      %v1452 = vpop.f32.mrf.mxu0
      %v1453 = vadd.f32 %v1385, %v1452
      %1454 = vmatmul.f32.gmra.mxu0 %v1321
      %v1455 = vpop.f32.mrf.mxu0
      %v1456 = vadd.f32 %v1385, %v1455
      %1457 = vmatmul.f32.gmra.mxu0 %v1323
      %v1458 = vpop.f32.mrf.mxu0
      %v1459 = vadd.f32 %v1385, %v1458
      %1460 = vmatmul.f32.gmra.mxu0 %v1325
      %v1461 = vpop.f32.mrf.mxu0
      %v1462 = vadd.f32 %v1385, %v1461
      %1463 = vmatmul.f32.gmra.mxu0 %v1327
      %v1464 = vpop.f32.mrf.mxu0
      %v1465 = vadd.f32 %v1385, %v1464
      %1466 = vmatmul.f32.gmra.mxu0 %v1329
      %v1467 = vpop.f32.mrf.mxu0
      %v1468 = vadd.f32 %v1385, %v1467
      %1469 = vmatmul.f32.gmra.mxu0 %v1331
      %v1470 = vpop.f32.mrf.mxu0
      %v1471 = vadd.f32 %v1385, %v1470
      %1472 = vmatmul.f32.gmra.mxu0 %v1333
      %v1473 = vpop.f32.mrf.mxu0
      %v1474 = vadd.f32 %v1385, %v1473
      %1475 = vmatmul.f32.gmra.mxu0 %v1335
      %v1476 = vpop.f32.mrf.mxu0
      %v1477 = vadd.f32 %v1385, %v1476
      %1478 = vmatmul.f32.gmra.mxu0 %v1337
      %v1479 = vpop.f32.mrf.mxu0
      %v1480 = vadd.f32 %v1385, %v1479
      %1481 = vmatmul.f32.gmra.mxu0 %v1339
      %v1482 = vpop.f32.mrf.mxu0
      %v1483 = vadd.f32 %v1385, %v1482
      %1484 = vmatmul.f32.gmra.mxu0 %v1341
      %v1485 = vpop.f32.mrf.mxu0
      %v1486 = vadd.f32 %v1385, %v1485
      %1487 = vmatmul.f32.gmra.mxu0 %v1343
      %v1488 = vpop.f32.mrf.mxu0
      %v1489 = vadd.f32 %v1385, %v1488
      %1490 = vmatmul.f32.gmra.mxu0 %v1345
      %v1491 = vpop.f32.mrf.mxu0
      %v1492 = vadd.f32 %v1385, %v1491
      %1493 = vmatmul.f32.gmra.mxu0 %v1347
      %v1494 = vpop.f32.mrf.mxu0
      %v1495 = vadd.f32 %v1385, %v1494
      %1496 = vmatmul.f32.gmra.mxu0 %v1349
      %v1497 = vpop.f32.mrf.mxu0
      %v1498 = vadd.f32 %v1385, %v1497
      %1499 = vdwg.mxu0
      %1500 = vmatpush.msra.mxu0 %v1382
      %1501 = vmatpush.msra.mxu0 %v1381
      %1502 = vmatpush.msra.mxu0 %v1380
      %1503 = vmatpush.msra.mxu0 %v1379
      %1504 = vmatpush.msra.mxu0 %v1378
      %1505 = vmatpush.msra.mxu0 %v1377
      %1506 = vmatpush.msra.mxu0 %v1376
      %1507 = vmatpush.msra.mxu0 %v1375
      %1508 = vmatpush.msra.mxu0 %v1374
      %1509 = vmatpush.msra.mxu0 %v1373
      %1510 = vmatpush.msra.mxu0 %v1372
      %1511 = vmatpush.msra.mxu0 %v1371
      %1512 = vmatpush.msra.mxu0 %v1370
      %1513 = vmatpush.msra.mxu0 %v1369
      %1514 = vmatpush.msra.mxu0 %v1368
      %1515 = vmatpush.msra.mxu0 %v1367
      %1516 = vmatmul.f32.gmra.mxu0 %v1288
      %v1517 = vpop.f32.mrf.mxu0
      %v1518 = vadd.f32 %v1405, %v1517
      %1519 = vmatmul.f32.gmra.mxu0 %v1290
      %v1520 = vpop.f32.mrf.mxu0
      %v1521 = vadd.f32 %v1408, %v1520
      %1522 = vmatmul.f32.gmra.mxu0 %v1292
      %v1523 = vpop.f32.mrf.mxu0
      %v1524 = vadd.f32 %v1411, %v1523
      %1525 = vmatmul.f32.gmra.mxu0 %v1294
      %v1526 = vpop.f32.mrf.mxu0
      %v1527 = vadd.f32 %v1414, %v1526
      %1528 = vmatmul.f32.gmra.mxu0 %v1296
      %v1529 = vpop.f32.mrf.mxu0
      %v1530 = vadd.f32 %v1417, %v1529
      %1531 = vmatmul.f32.gmra.mxu0 %v1298
      %v1532 = vpop.f32.mrf.mxu0
      %v1533 = vadd.f32 %v1420, %v1532
      %1534 = vmatmul.f32.gmra.mxu0 %v1300
      %v1535 = vpop.f32.mrf.mxu0
      %v1536 = vadd.f32 %v1423, %v1535
      %1537 = vmatmul.f32.gmra.mxu0 %v1302
      %v1538 = vpop.f32.mrf.mxu0
      %v1539 = vadd.f32 %v1426, %v1538
      %1540 = vmatmul.f32.gmra.mxu0 %v1304
      %v1541 = vpop.f32.mrf.mxu0
      %v1542 = vadd.f32 %v1429, %v1541
      %1543 = vmatmul.f32.gmra.mxu0 %v1306
      %v1544 = vpop.f32.mrf.mxu0
      %v1545 = vadd.f32 %v1432, %v1544
      %1546 = vmatmul.f32.gmra.mxu0 %v1308
      %v1547 = vpop.f32.mrf.mxu0
      %v1548 = vadd.f32 %v1435, %v1547
      %1549 = vmatmul.f32.gmra.mxu0 %v1310
      %v1550 = vpop.f32.mrf.mxu0
      %v1551 = vadd.f32 %v1438, %v1550
      %1552 = vmatmul.f32.gmra.mxu0 %v1312
      %v1553 = vpop.f32.mrf.mxu0
      %v1554 = vadd.f32 %v1441, %v1553
      %1555 = vmatmul.f32.gmra.mxu0 %v1314
      %v1556 = vpop.f32.mrf.mxu0
      %v1557 = vadd.f32 %v1444, %v1556
      %1558 = vmatmul.f32.gmra.mxu0 %v1316
      %v1559 = vpop.f32.mrf.mxu0
      %v1560 = vadd.f32 %v1447, %v1559
      %1561 = vmatmul.f32.gmra.mxu0 %v1318
      %v1562 = vpop.f32.mrf.mxu0
      %v1563 = vadd.f32 %v1450, %v1562
      %1564 = vmatmul.f32.gmra.mxu0 %v1320
      %v1565 = vpop.f32.mrf.mxu0
      %v1566 = vadd.f32 %v1453, %v1565
      %1567 = vmatmul.f32.gmra.mxu0 %v1322
      %v1568 = vpop.f32.mrf.mxu0
      %v1569 = vadd.f32 %v1456, %v1568
      %1570 = vmatmul.f32.gmra.mxu0 %v1324
      %v1571 = vpop.f32.mrf.mxu0
      %v1572 = vadd.f32 %v1459, %v1571
      %1573 = vmatmul.f32.gmra.mxu0 %v1326
      %v1574 = vpop.f32.mrf.mxu0
      %v1575 = vadd.f32 %v1462, %v1574
      %1576 = vmatmul.f32.gmra.mxu0 %v1328
      %v1577 = vpop.f32.mrf.mxu0
      %v1578 = vadd.f32 %v1465, %v1577
      %1579 = vmatmul.f32.gmra.mxu0 %v1330
      %v1580 = vpop.f32.mrf.mxu0
      %v1581 = vadd.f32 %v1468, %v1580
      %1582 = vmatmul.f32.gmra.mxu0 %v1332
      %v1583 = vpop.f32.mrf.mxu0
      %v1584 = vadd.f32 %v1471, %v1583
      %1585 = vmatmul.f32.gmra.mxu0 %v1334
      %v1586 = vpop.f32.mrf.mxu0
      %v1587 = vadd.f32 %v1474, %v1586
      %1588 = vmatmul.f32.gmra.mxu0 %v1336
      %v1589 = vpop.f32.mrf.mxu0
      %v1590 = vadd.f32 %v1477, %v1589
      %1591 = vmatmul.f32.gmra.mxu0 %v1338
      %v1592 = vpop.f32.mrf.mxu0
      %v1593 = vadd.f32 %v1480, %v1592
      %1594 = vmatmul.f32.gmra.mxu0 %v1340
      %v1595 = vpop.f32.mrf.mxu0
      %v1596 = vadd.f32 %v1483, %v1595
      %1597 = vmatmul.f32.gmra.mxu0 %v1342
      %v1598 = vpop.f32.mrf.mxu0
      %v1599 = vadd.f32 %v1486, %v1598
      %1600 = vmatmul.f32.gmra.mxu0 %v1344
      %v1601 = vpop.f32.mrf.mxu0
      %v1602 = vadd.f32 %v1489, %v1601
      %1603 = vmatmul.f32.gmra.mxu0 %v1346
      %v1604 = vpop.f32.mrf.mxu0
      %v1605 = vadd.f32 %v1492, %v1604
      %1606 = vmatmul.f32.gmra.mxu0 %v1348
      %v1607 = vpop.f32.mrf.mxu0
      %v1608 = vadd.f32 %v1495, %v1607
      %1609 = vmatmul.f32.gmra.mxu0 %v1350
      %v1610 = vpop.f32.mrf.mxu0
      %v1611 = vadd.f32 %v1498, %v1610
      %1612 = vdwg.mxu0
      %vm1613 = vcmp.gt.f32.partialorder %v1518, 0.0
      %vm1614 = vcmp.gt.f32.partialorder %v1521, 0.0
      %vm1615 = vcmp.gt.f32.partialorder %v1524, 0.0
      %vm1616 = vcmp.gt.f32.partialorder %v1527, 0.0
      %vm1617 = vcmp.gt.f32.partialorder %v1530, 0.0
      %vm1618 = vcmp.gt.f32.partialorder %v1533, 0.0
      %vm1619 = vcmp.gt.f32.partialorder %v1536, 0.0
      %vm1620 = vcmp.gt.f32.partialorder %v1539, 0.0
      %vm1621 = vcmp.gt.f32.partialorder %v1542, 0.0
      %vm1622 = vcmp.gt.f32.partialorder %v1545, 0.0
      %vm1623 = vcmp.gt.f32.partialorder %v1548, 0.0
      %vm1624 = vcmp.gt.f32.partialorder %v1551, 0.0
      %vm1625 = vcmp.gt.f32.partialorder %v1554, 0.0
      %vm1626 = vcmp.gt.f32.partialorder %v1557, 0.0
      %vm1627 = vcmp.gt.f32.partialorder %v1560, 0.0
      %vm1628 = vcmp.gt.f32.partialorder %v1563, 0.0
      %vm1629 = vcmp.gt.f32.partialorder %v1566, 0.0
      %vm1630 = vcmp.gt.f32.partialorder %v1569, 0.0
      %vm1631 = vcmp.gt.f32.partialorder %v1572, 0.0
      %vm1632 = vcmp.gt.f32.partialorder %v1575, 0.0
      %vm1633 = vcmp.gt.f32.partialorder %v1578, 0.0
      %vm1634 = vcmp.gt.f32.partialorder %v1581, 0.0
      %vm1635 = vcmp.gt.f32.partialorder %v1584, 0.0
      %vm1636 = vcmp.gt.f32.partialorder %v1587, 0.0
      %vm1637 = vcmp.gt.f32.partialorder %v1590, 0.0
      %vm1638 = vcmp.gt.f32.partialorder %v1593, 0.0
      %vm1639 = vcmp.gt.f32.partialorder %v1596, 0.0
      %vm1640 = vcmp.gt.f32.partialorder %v1599, 0.0
      %vm1641 = vcmp.gt.f32.partialorder %v1602, 0.0
      %vm1642 = vcmp.gt.f32.partialorder %v1605, 0.0
      %vm1643 = vcmp.gt.f32.partialorder %v1608, 0.0
      %vm1644 = vcmp.gt.f32.partialorder %v1611, 0.0
      %v1645 = vmul.f32 %v1518, 0.2
      %v1646 = vmul.f32 %v1521, 0.2
      %v1647 = vmul.f32 %v1524, 0.2
      %v1648 = vmul.f32 %v1527, 0.2
      %v1649 = vmul.f32 %v1530, 0.2
      %v1650 = vmul.f32 %v1533, 0.2
      %v1651 = vmul.f32 %v1536, 0.2
      %v1652 = vmul.f32 %v1539, 0.2
      %v1653 = vmul.f32 %v1542, 0.2
      %v1654 = vmul.f32 %v1545, 0.2
      %v1655 = vmul.f32 %v1548, 0.2
      %v1656 = vmul.f32 %v1551, 0.2
      %v1657 = vmul.f32 %v1554, 0.2
      %v1658 = vmul.f32 %v1557, 0.2
      %v1659 = vmul.f32 %v1560, 0.2
      %v1660 = vmul.f32 %v1563, 0.2
      %v1661 = vmul.f32 %v1566, 0.2
      %v1662 = vmul.f32 %v1569, 0.2
      %v1663 = vmul.f32 %v1572, 0.2
      %v1664 = vmul.f32 %v1575, 0.2
      %v1665 = vmul.f32 %v1578, 0.2
      %v1666 = vmul.f32 %v1581, 0.2
      %v1667 = vmul.f32 %v1584, 0.2
      %v1668 = vmul.f32 %v1587, 0.2
      %v1669 = vmul.f32 %v1590, 0.2
      %v1670 = vmul.f32 %v1593, 0.2
      %v1671 = vmul.f32 %v1596, 0.2
      %v1672 = vmul.f32 %v1599, 0.2
      %v1673 = vmul.f32 %v1602, 0.2
      %v1674 = vmul.f32 %v1605, 0.2
      %v1675 = vmul.f32 %v1608, 0.2
      %v1676 = vmul.f32 %v1611, 0.2
      %v1677 = vsel %vm1613, %v1518, %v1645
      %v1678 = vsel %vm1614, %v1521, %v1646
      %v1679 = vsel %vm1615, %v1524, %v1647
      %v1680 = vsel %vm1616, %v1527, %v1648
      %v1681 = vsel %vm1617, %v1530, %v1649
      %v1682 = vsel %vm1618, %v1533, %v1650
      %v1683 = vsel %vm1619, %v1536, %v1651
      %v1684 = vsel %vm1620, %v1539, %v1652
      %v1685 = vsel %vm1621, %v1542, %v1653
      %v1686 = vsel %vm1622, %v1545, %v1654
      %v1687 = vsel %vm1623, %v1548, %v1655
      %v1688 = vsel %vm1624, %v1551, %v1656
      %v1689 = vsel %vm1625, %v1554, %v1657
      %v1690 = vsel %vm1626, %v1557, %v1658
      %v1691 = vsel %vm1627, %v1560, %v1659
      %v1692 = vsel %vm1628, %v1563, %v1660
      %v1693 = vsel %vm1629, %v1566, %v1661
      %v1694 = vsel %vm1630, %v1569, %v1662
      %v1695 = vsel %vm1631, %v1572, %v1663
      %v1696 = vsel %vm1632, %v1575, %v1664
      %v1697 = vsel %vm1633, %v1578, %v1665
      %v1698 = vsel %vm1634, %v1581, %v1666
      %v1699 = vsel %vm1635, %v1584, %v1667
      %v1700 = vsel %vm1636, %v1587, %v1668
      %v1701 = vsel %vm1637, %v1590, %v1669
      %v1702 = vsel %vm1638, %v1593, %v1670
      %v1703 = vsel %vm1639, %v1596, %v1671
      %v1704 = vsel %vm1640, %v1599, %v1672
      %v1705 = vsel %vm1641, %v1602, %v1673
      %v1706 = vsel %vm1642, %v1605, %v1674
      %v1707 = vsel %vm1643, %v1608, %v1675
      %v1708 = vsel %vm1644, %v1611, %v1676
      %v1709 = vld [vmem:[%s7] sm:$0x1]
      %v1711 = vperm.slane %v1709, 0
      %v1713 = vmul.f32 %v1677, %v1711
      %v1714 = vmul.f32 %v1678, %v1711
      %v1715 = vmul.f32 %v1679, %v1711
      %v1716 = vmul.f32 %v1680, %v1711
      %v1717 = vmul.f32 %v1681, %v1711
      %v1718 = vmul.f32 %v1682, %v1711
      %v1719 = vmul.f32 %v1683, %v1711
      %v1720 = vmul.f32 %v1684, %v1711
      %v1721 = vmul.f32 %v1685, %v1711
      %v1722 = vmul.f32 %v1686, %v1711
      %v1723 = vmul.f32 %v1687, %v1711
      %v1724 = vmul.f32 %v1688, %v1711
      %v1725 = vmul.f32 %v1689, %v1711
      %v1726 = vmul.f32 %v1690, %v1711
      %v1727 = vmul.f32 %v1691, %v1711
      %v1728 = vmul.f32 %v1692, %v1711
      %v1729 = vmul.f32 %v1693, %v1711
      %v1730 = vmul.f32 %v1694, %v1711
      %v1731 = vmul.f32 %v1695, %v1711
      %v1732 = vmul.f32 %v1696, %v1711
      %v1733 = vmul.f32 %v1697, %v1711
      %v1734 = vmul.f32 %v1698, %v1711
      %v1735 = vmul.f32 %v1699, %v1711
      %v1736 = vmul.f32 %v1700, %v1711
      %v1737 = vmul.f32 %v1701, %v1711
      %v1738 = vmul.f32 %v1702, %v1711
      %v1739 = vmul.f32 %v1703, %v1711
      %v1740 = vmul.f32 %v1704, %v1711
      %v1741 = vmul.f32 %v1705, %v1711
      %v1742 = vmul.f32 %v1706, %v1711
      %v1743 = vmul.f32 %v1707, %v1711
      %v1744 = vmul.f32 %v1708, %v1711
      %1745 = vadd.xlane.f32.xlu0 %v1713
      %v1746 = vpop.xlane.xlu0 %1745
      %1747 = vadd.xlane.f32.xlu0 %v1714
      %v1748 = vpop.xlane.xlu0 %1747
      %1749 = vadd.xlane.f32.xlu0 %v1715
      %v1750 = vpop.xlane.xlu0 %1749
      %1751 = vadd.xlane.f32.xlu0 %v1716
      %v1752 = vpop.xlane.xlu0 %1751
      %1753 = vadd.xlane.f32.xlu0 %v1717
      %v1754 = vpop.xlane.xlu0 %1753
      %1755 = vadd.xlane.f32.xlu0 %v1718
      %v1756 = vpop.xlane.xlu0 %1755
      %1757 = vadd.xlane.f32.xlu0 %v1719
      %v1758 = vpop.xlane.xlu0 %1757
      %1759 = vadd.xlane.f32.xlu0 %v1720
      %v1760 = vpop.xlane.xlu0 %1759
      %1761 = vadd.xlane.f32.xlu0 %v1721
      %v1762 = vpop.xlane.xlu0 %1761
      %1763 = vadd.xlane.f32.xlu0 %v1722
      %v1764 = vpop.xlane.xlu0 %1763
      %1765 = vadd.xlane.f32.xlu0 %v1723
      %v1766 = vpop.xlane.xlu0 %1765
      %1767 = vadd.xlane.f32.xlu0 %v1724
      %v1768 = vpop.xlane.xlu0 %1767
      %1769 = vadd.xlane.f32.xlu0 %v1725
      %v1770 = vpop.xlane.xlu0 %1769
      %1771 = vadd.xlane.f32.xlu0 %v1726
      %v1772 = vpop.xlane.xlu0 %1771
      %1773 = vadd.xlane.f32.xlu0 %v1727
      %v1774 = vpop.xlane.xlu0 %1773
      %1775 = vadd.xlane.f32.xlu0 %v1728
      %v1776 = vpop.xlane.xlu0 %1775
      %1777 = vadd.xlane.f32.xlu0 %v1729
      %v1778 = vpop.xlane.xlu0 %1777
      %1779 = vadd.xlane.f32.xlu0 %v1730
      %v1780 = vpop.xlane.xlu0 %1779
      %1781 = vadd.xlane.f32.xlu0 %v1731
      %v1782 = vpop.xlane.xlu0 %1781
      %1783 = vadd.xlane.f32.xlu0 %v1732
      %v1784 = vpop.xlane.xlu0 %1783
      %1785 = vadd.xlane.f32.xlu0 %v1733
      %v1786 = vpop.xlane.xlu0 %1785
      %1787 = vadd.xlane.f32.xlu0 %v1734
      %v1788 = vpop.xlane.xlu0 %1787
      %1789 = vadd.xlane.f32.xlu0 %v1735
      %v1790 = vpop.xlane.xlu0 %1789
      %1791 = vadd.xlane.f32.xlu0 %v1736
      %v1792 = vpop.xlane.xlu0 %1791
      %1793 = vadd.xlane.f32.xlu0 %v1737
      %v1794 = vpop.xlane.xlu0 %1793
      %1795 = vadd.xlane.f32.xlu0 %v1738
      %v1796 = vpop.xlane.xlu0 %1795
      %1797 = vadd.xlane.f32.xlu0 %v1739
      %v1798 = vpop.xlane.xlu0 %1797
      %1799 = vadd.xlane.f32.xlu0 %v1740
      %v1800 = vpop.xlane.xlu0 %1799
      %1801 = vadd.xlane.f32.xlu0 %v1741
      %v1802 = vpop.xlane.xlu0 %1801
      %1803 = vadd.xlane.f32.xlu0 %v1742
      %v1804 = vpop.xlane.xlu0 %1803
      %1805 = vadd.xlane.f32.xlu0 %v1743
      %v1806 = vpop.xlane.xlu0 %1805
      %1807 = vadd.xlane.f32.xlu0 %v1744
      %v1808 = vpop.xlane.xlu0 %1807
      %s1809 = sld [smem:[#allocation2]]
      %v1810 = vstv %s1809
      %v1811 = vadd.f32 %v1746, %v1810
      %v1812 = vadd.f32 %v1748, %v1810
      %v1813 = vadd.f32 %v1750, %v1810
      %v1814 = vadd.f32 %v1752, %v1810
      %v1815 = vadd.f32 %v1754, %v1810
      %v1816 = vadd.f32 %v1756, %v1810
      %v1817 = vadd.f32 %v1758, %v1810
      %v1818 = vadd.f32 %v1760, %v1810
      %v1819 = vadd.f32 %v1762, %v1810
      %v1820 = vadd.f32 %v1764, %v1810
      %v1821 = vadd.f32 %v1766, %v1810
      %v1822 = vadd.f32 %v1768, %v1810
      %v1823 = vadd.f32 %v1770, %v1810
      %v1824 = vadd.f32 %v1772, %v1810
      %v1825 = vadd.f32 %v1774, %v1810
      %v1826 = vadd.f32 %v1776, %v1810
      %v1827 = vadd.f32 %v1778, %v1810
      %v1828 = vadd.f32 %v1780, %v1810
      %v1829 = vadd.f32 %v1782, %v1810
      %v1830 = vadd.f32 %v1784, %v1810
      %v1831 = vadd.f32 %v1786, %v1810
      %v1832 = vadd.f32 %v1788, %v1810
      %v1833 = vadd.f32 %v1790, %v1810
      %v1834 = vadd.f32 %v1792, %v1810
      %v1835 = vadd.f32 %v1794, %v1810
      %v1836 = vadd.f32 %v1796, %v1810
      %v1837 = vadd.f32 %v1798, %v1810
      %v1838 = vadd.f32 %v1800, %v1810
      %v1839 = vadd.f32 %v1802, %v1810
      %v1840 = vadd.f32 %v1804, %v1810
      %v1841 = vadd.f32 %v1806, %v1810
      %v1842 = vadd.f32 %v1808, %v1810
      %v1843 = vsub.f32 0.0, %v1811
      %v1844 = vsub.f32 0.0, %v1812
      %v1845 = vsub.f32 0.0, %v1813
      %v1846 = vsub.f32 0.0, %v1814
      %v1847 = vsub.f32 0.0, %v1815
      %v1848 = vsub.f32 0.0, %v1816
      %v1849 = vsub.f32 0.0, %v1817
      %v1850 = vsub.f32 0.0, %v1818
      %v1851 = vsub.f32 0.0, %v1819
      %v1852 = vsub.f32 0.0, %v1820
      %v1853 = vsub.f32 0.0, %v1821
      %v1854 = vsub.f32 0.0, %v1822
      %v1855 = vsub.f32 0.0, %v1823
      %v1856 = vsub.f32 0.0, %v1824
      %v1857 = vsub.f32 0.0, %v1825
      %v1858 = vsub.f32 0.0, %v1826
      %v1859 = vsub.f32 0.0, %v1827
      %v1860 = vsub.f32 0.0, %v1828
      %v1861 = vsub.f32 0.0, %v1829
      %v1862 = vsub.f32 0.0, %v1830
      %v1863 = vsub.f32 0.0, %v1831
      %v1864 = vsub.f32 0.0, %v1832
      %v1865 = vsub.f32 0.0, %v1833
      %v1866 = vsub.f32 0.0, %v1834
      %v1867 = vsub.f32 0.0, %v1835
      %v1868 = vsub.f32 0.0, %v1836
      %v1869 = vsub.f32 0.0, %v1837
      %v1870 = vsub.f32 0.0, %v1838
      %v1871 = vsub.f32 0.0, %v1839
      %v1872 = vsub.f32 0.0, %v1840
      %v1873 = vsub.f32 0.0, %v1841
      %v1874 = vsub.f32 0.0, %v1842
      %v1875 = vmul.f32 %v1843, 1.442695
      %v1876 = vpow.pop %v1875
      %v1877 = vmul.f32 %v1844, 1.442695
      %v1878 = vpow.pop %v1877
      %v1879 = vmul.f32 %v1845, 1.442695
      %v1880 = vpow.pop %v1879
      %v1881 = vmul.f32 %v1846, 1.442695
      %v1882 = vpow.pop %v1881
      %v1883 = vmul.f32 %v1847, 1.442695
      %v1884 = vpow.pop %v1883
      %v1885 = vmul.f32 %v1848, 1.442695
      %v1886 = vpow.pop %v1885
      %v1887 = vmul.f32 %v1849, 1.442695
      %v1888 = vpow.pop %v1887
      %v1889 = vmul.f32 %v1850, 1.442695
      %v1890 = vpow.pop %v1889
      %v1891 = vmul.f32 %v1851, 1.442695
      %v1892 = vpow.pop %v1891
      %v1893 = vmul.f32 %v1852, 1.442695
      %v1894 = vpow.pop %v1893
      %v1895 = vmul.f32 %v1853, 1.442695
      %v1896 = vpow.pop %v1895
      %v1897 = vmul.f32 %v1854, 1.442695
      %v1898 = vpow.pop %v1897
      %v1899 = vmul.f32 %v1855, 1.442695
      %v1900 = vpow.pop %v1899
      %v1901 = vmul.f32 %v1856, 1.442695
      %v1902 = vpow.pop %v1901
      %v1903 = vmul.f32 %v1857, 1.442695
      %v1904 = vpow.pop %v1903
      %v1905 = vmul.f32 %v1858, 1.442695
      %v1906 = vpow.pop %v1905
      %v1907 = vmul.f32 %v1859, 1.442695
      %v1908 = vpow.pop %v1907
      %v1909 = vmul.f32 %v1860, 1.442695
      %v1910 = vpow.pop %v1909
      %v1911 = vmul.f32 %v1861, 1.442695
      %v1912 = vpow.pop %v1911
      %v1913 = vmul.f32 %v1862, 1.442695
      %v1914 = vpow.pop %v1913
      %v1915 = vmul.f32 %v1863, 1.442695
      %v1916 = vpow.pop %v1915
      %v1917 = vmul.f32 %v1864, 1.442695
      %v1918 = vpow.pop %v1917
      %v1919 = vmul.f32 %v1865, 1.442695
      %v1920 = vpow.pop %v1919
      %v1921 = vmul.f32 %v1866, 1.442695
      %v1922 = vpow.pop %v1921
      %v1923 = vmul.f32 %v1867, 1.442695
      %v1924 = vpow.pop %v1923
      %v1925 = vmul.f32 %v1868, 1.442695
      %v1926 = vpow.pop %v1925
      %v1927 = vmul.f32 %v1869, 1.442695
      %v1928 = vpow.pop %v1927
      %v1929 = vmul.f32 %v1870, 1.442695
      %v1930 = vpow.pop %v1929
      %v1931 = vmul.f32 %v1871, 1.442695
      %v1932 = vpow.pop %v1931
      %v1933 = vmul.f32 %v1872, 1.442695
      %v1934 = vpow.pop %v1933
      %v1935 = vmul.f32 %v1873, 1.442695
      %v1936 = vpow.pop %v1935
      %v1937 = vmul.f32 %v1874, 1.442695
      %v1938 = vpow.pop %v1937
      %v1939 = vadd.f32 %v1876, 1.0
      %v1940 = vadd.f32 %v1878, 1.0
      %v1941 = vadd.f32 %v1880, 1.0
      %v1942 = vadd.f32 %v1882, 1.0
      %v1943 = vadd.f32 %v1884, 1.0
      %v1944 = vadd.f32 %v1886, 1.0
      %v1945 = vadd.f32 %v1888, 1.0
      %v1946 = vadd.f32 %v1890, 1.0
      %v1947 = vadd.f32 %v1892, 1.0
      %v1948 = vadd.f32 %v1894, 1.0
      %v1949 = vadd.f32 %v1896, 1.0
      %v1950 = vadd.f32 %v1898, 1.0
      %v1951 = vadd.f32 %v1900, 1.0
      %v1952 = vadd.f32 %v1902, 1.0
      %v1953 = vadd.f32 %v1904, 1.0
      %v1954 = vadd.f32 %v1906, 1.0
      %v1955 = vadd.f32 %v1908, 1.0
      %v1956 = vadd.f32 %v1910, 1.0
      %v1957 = vadd.f32 %v1912, 1.0
      %v1958 = vadd.f32 %v1914, 1.0
      %v1959 = vadd.f32 %v1916, 1.0
      %v1960 = vadd.f32 %v1918, 1.0
      %v1961 = vadd.f32 %v1920, 1.0
      %v1962 = vadd.f32 %v1922, 1.0
      %v1963 = vadd.f32 %v1924, 1.0
      %v1964 = vadd.f32 %v1926, 1.0
      %v1965 = vadd.f32 %v1928, 1.0
      %v1966 = vadd.f32 %v1930, 1.0
      %v1967 = vadd.f32 %v1932, 1.0
      %v1968 = vadd.f32 %v1934, 1.0
      %v1969 = vadd.f32 %v1936, 1.0
      %v1970 = vadd.f32 %v1938, 1.0
      %v1971 = vrcp.pop %v1939
      %v1972 = vmul.f32 %v1939, %v1971
      %v1973 = vsub.f32 1.0, %v1972
      %v1974 = vmul.f32 %v1971, %v1973
      %v1975 = vadd.f32 %v1971, %v1974
      %vm1976 = vweird.f32 %v1939
      %vm1977 = vweird.f32 %v1971
      %vm1978 = vmor %vm1976, %vm1977
      %v1979 = vsel %vm1978, %v1971, %v1975
      %v1980 = vand.u32 2147483647, %v1939
      %vm1981 = vcmp.eq.f32.partialorder %v1980, 8.507059e+37
      %v1982 = vand.u32 %v1939, 2147483648
      %v1983 = vor.u32 1.1754944e-38, %v1982
      %v1984 = vsel %vm1981, %v1983, %v1979
      %v1985 = vrcp.pop %v1940
      %v1986 = vmul.f32 %v1940, %v1985
      %v1987 = vsub.f32 1.0, %v1986
      %v1988 = vmul.f32 %v1985, %v1987
      %v1989 = vadd.f32 %v1985, %v1988
      %vm1990 = vweird.f32 %v1940
      %vm1991 = vweird.f32 %v1985
      %vm1992 = vmor %vm1990, %vm1991
      %v1993 = vsel %vm1992, %v1985, %v1989
      %v1994 = vand.u32 2147483647, %v1940
      %vm1995 = vcmp.eq.f32.partialorder %v1994, 8.507059e+37
      %v1996 = vand.u32 %v1940, 2147483648
      %v1997 = vor.u32 1.1754944e-38, %v1996
      %v1998 = vsel %vm1995, %v1997, %v1993
      %v1999 = vrcp.pop %v1941
      %v2000 = vmul.f32 %v1941, %v1999
      %v2001 = vsub.f32 1.0, %v2000
      %v2002 = vmul.f32 %v1999, %v2001
      %v2003 = vadd.f32 %v1999, %v2002
      %vm2004 = vweird.f32 %v1941
      %vm2005 = vweird.f32 %v1999
      %vm2006 = vmor %vm2004, %vm2005
      %v2007 = vsel %vm2006, %v1999, %v2003
      %v2008 = vand.u32 2147483647, %v1941
      %vm2009 = vcmp.eq.f32.partialorder %v2008, 8.507059e+37
      %v2010 = vand.u32 %v1941, 2147483648
      %v2011 = vor.u32 1.1754944e-38, %v2010
      %v2012 = vsel %vm2009, %v2011, %v2007
      %v2013 = vrcp.pop %v1942
      %v2014 = vmul.f32 %v1942, %v2013
      %v2015 = vsub.f32 1.0, %v2014
      %v2016 = vmul.f32 %v2013, %v2015
      %v2017 = vadd.f32 %v2013, %v2016
      %vm2018 = vweird.f32 %v1942
      %vm2019 = vweird.f32 %v2013
      %vm2020 = vmor %vm2018, %vm2019
      %v2021 = vsel %vm2020, %v2013, %v2017
      %v2022 = vand.u32 2147483647, %v1942
      %vm2023 = vcmp.eq.f32.partialorder %v2022, 8.507059e+37
      %v2024 = vand.u32 %v1942, 2147483648
      %v2025 = vor.u32 1.1754944e-38, %v2024
      %v2026 = vsel %vm2023, %v2025, %v2021
      %v2027 = vrcp.pop %v1943
      %v2028 = vmul.f32 %v1943, %v2027
      %v2029 = vsub.f32 1.0, %v2028
      %v2030 = vmul.f32 %v2027, %v2029
      %v2031 = vadd.f32 %v2027, %v2030
      %vm2032 = vweird.f32 %v1943
      %vm2033 = vweird.f32 %v2027
      %vm2034 = vmor %vm2032, %vm2033
      %v2035 = vsel %vm2034, %v2027, %v2031
      %v2036 = vand.u32 2147483647, %v1943
      %vm2037 = vcmp.eq.f32.partialorder %v2036, 8.507059e+37
      %v2038 = vand.u32 %v1943, 2147483648
      %v2039 = vor.u32 1.1754944e-38, %v2038
      %v2040 = vsel %vm2037, %v2039, %v2035
      %v2041 = vrcp.pop %v1944
      %v2042 = vmul.f32 %v1944, %v2041
      %v2043 = vsub.f32 1.0, %v2042
      %v2044 = vmul.f32 %v2041, %v2043
      %v2045 = vadd.f32 %v2041, %v2044
      %vm2046 = vweird.f32 %v1944
      %vm2047 = vweird.f32 %v2041
      %vm2048 = vmor %vm2046, %vm2047
      %v2049 = vsel %vm2048, %v2041, %v2045
      %v2050 = vand.u32 2147483647, %v1944
      %vm2051 = vcmp.eq.f32.partialorder %v2050, 8.507059e+37
      %v2052 = vand.u32 %v1944, 2147483648
      %v2053 = vor.u32 1.1754944e-38, %v2052
      %v2054 = vsel %vm2051, %v2053, %v2049
      %v2055 = vrcp.pop %v1945
      %v2056 = vmul.f32 %v1945, %v2055
      %v2057 = vsub.f32 1.0, %v2056
      %v2058 = vmul.f32 %v2055, %v2057
      %v2059 = vadd.f32 %v2055, %v2058
      %vm2060 = vweird.f32 %v1945
      %vm2061 = vweird.f32 %v2055
      %vm2062 = vmor %vm2060, %vm2061
      %v2063 = vsel %vm2062, %v2055, %v2059
      %v2064 = vand.u32 2147483647, %v1945
      %vm2065 = vcmp.eq.f32.partialorder %v2064, 8.507059e+37
      %v2066 = vand.u32 %v1945, 2147483648
      %v2067 = vor.u32 1.1754944e-38, %v2066
      %v2068 = vsel %vm2065, %v2067, %v2063
      %v2069 = vrcp.pop %v1946
      %v2070 = vmul.f32 %v1946, %v2069
      %v2071 = vsub.f32 1.0, %v2070
      %v2072 = vmul.f32 %v2069, %v2071
      %v2073 = vadd.f32 %v2069, %v2072
      %vm2074 = vweird.f32 %v1946
      %vm2075 = vweird.f32 %v2069
      %vm2076 = vmor %vm2074, %vm2075
      %v2077 = vsel %vm2076, %v2069, %v2073
      %v2078 = vand.u32 2147483647, %v1946
      %vm2079 = vcmp.eq.f32.partialorder %v2078, 8.507059e+37
      %v2080 = vand.u32 %v1946, 2147483648
      %v2081 = vor.u32 1.1754944e-38, %v2080
      %v2082 = vsel %vm2079, %v2081, %v2077
      %v2083 = vrcp.pop %v1947
      %v2084 = vmul.f32 %v1947, %v2083
      %v2085 = vsub.f32 1.0, %v2084
      %v2086 = vmul.f32 %v2083, %v2085
      %v2087 = vadd.f32 %v2083, %v2086
      %vm2088 = vweird.f32 %v1947
      %vm2089 = vweird.f32 %v2083
      %vm2090 = vmor %vm2088, %vm2089
      %v2091 = vsel %vm2090, %v2083, %v2087
      %v2092 = vand.u32 2147483647, %v1947
      %vm2093 = vcmp.eq.f32.partialorder %v2092, 8.507059e+37
      %v2094 = vand.u32 %v1947, 2147483648
      %v2095 = vor.u32 1.1754944e-38, %v2094
      %v2096 = vsel %vm2093, %v2095, %v2091
      %v2097 = vrcp.pop %v1948
      %v2098 = vmul.f32 %v1948, %v2097
      %v2099 = vsub.f32 1.0, %v2098
      %v2100 = vmul.f32 %v2097, %v2099
      %v2101 = vadd.f32 %v2097, %v2100
      %vm2102 = vweird.f32 %v1948
      %vm2103 = vweird.f32 %v2097
      %vm2104 = vmor %vm2102, %vm2103
      %v2105 = vsel %vm2104, %v2097, %v2101
      %v2106 = vand.u32 2147483647, %v1948
      %vm2107 = vcmp.eq.f32.partialorder %v2106, 8.507059e+37
      %v2108 = vand.u32 %v1948, 2147483648
      %v2109 = vor.u32 1.1754944e-38, %v2108
      %v2110 = vsel %vm2107, %v2109, %v2105
      %v2111 = vrcp.pop %v1949
      %v2112 = vmul.f32 %v1949, %v2111
      %v2113 = vsub.f32 1.0, %v2112
      %v2114 = vmul.f32 %v2111, %v2113
      %v2115 = vadd.f32 %v2111, %v2114
      %vm2116 = vweird.f32 %v1949
      %vm2117 = vweird.f32 %v2111
      %vm2118 = vmor %vm2116, %vm2117
      %v2119 = vsel %vm2118, %v2111, %v2115
      %v2120 = vand.u32 2147483647, %v1949
      %vm2121 = vcmp.eq.f32.partialorder %v2120, 8.507059e+37
      %v2122 = vand.u32 %v1949, 2147483648
      %v2123 = vor.u32 1.1754944e-38, %v2122
      %v2124 = vsel %vm2121, %v2123, %v2119
      %v2125 = vrcp.pop %v1950
      %v2126 = vmul.f32 %v1950, %v2125
      %v2127 = vsub.f32 1.0, %v2126
      %v2128 = vmul.f32 %v2125, %v2127
      %v2129 = vadd.f32 %v2125, %v2128
      %vm2130 = vweird.f32 %v1950
      %vm2131 = vweird.f32 %v2125
      %vm2132 = vmor %vm2130, %vm2131
      %v2133 = vsel %vm2132, %v2125, %v2129
      %v2134 = vand.u32 2147483647, %v1950
      %vm2135 = vcmp.eq.f32.partialorder %v2134, 8.507059e+37
      %v2136 = vand.u32 %v1950, 2147483648
      %v2137 = vor.u32 1.1754944e-38, %v2136
      %v2138 = vsel %vm2135, %v2137, %v2133
      %v2139 = vrcp.pop %v1951
      %v2140 = vmul.f32 %v1951, %v2139
      %v2141 = vsub.f32 1.0, %v2140
      %v2142 = vmul.f32 %v2139, %v2141
      %v2143 = vadd.f32 %v2139, %v2142
      %vm2144 = vweird.f32 %v1951
      %vm2145 = vweird.f32 %v2139
      %vm2146 = vmor %vm2144, %vm2145
      %v2147 = vsel %vm2146, %v2139, %v2143
      %v2148 = vand.u32 2147483647, %v1951
      %vm2149 = vcmp.eq.f32.partialorder %v2148, 8.507059e+37
      %v2150 = vand.u32 %v1951, 2147483648
      %v2151 = vor.u32 1.1754944e-38, %v2150
      %v2152 = vsel %vm2149, %v2151, %v2147
      %v2153 = vrcp.pop %v1952
      %v2154 = vmul.f32 %v1952, %v2153
      %v2155 = vsub.f32 1.0, %v2154
      %v2156 = vmul.f32 %v2153, %v2155
      %v2157 = vadd.f32 %v2153, %v2156
      %vm2158 = vweird.f32 %v1952
      %vm2159 = vweird.f32 %v2153
      %vm2160 = vmor %vm2158, %vm2159
      %v2161 = vsel %vm2160, %v2153, %v2157
      %v2162 = vand.u32 2147483647, %v1952
      %vm2163 = vcmp.eq.f32.partialorder %v2162, 8.507059e+37
      %v2164 = vand.u32 %v1952, 2147483648
      %v2165 = vor.u32 1.1754944e-38, %v2164
      %v2166 = vsel %vm2163, %v2165, %v2161
      %v2167 = vrcp.pop %v1953
      %v2168 = vmul.f32 %v1953, %v2167
      %v2169 = vsub.f32 1.0, %v2168
      %v2170 = vmul.f32 %v2167, %v2169
      %v2171 = vadd.f32 %v2167, %v2170
      %vm2172 = vweird.f32 %v1953
      %vm2173 = vweird.f32 %v2167
      %vm2174 = vmor %vm2172, %vm2173
      %v2175 = vsel %vm2174, %v2167, %v2171
      %v2176 = vand.u32 2147483647, %v1953
      %vm2177 = vcmp.eq.f32.partialorder %v2176, 8.507059e+37
      %v2178 = vand.u32 %v1953, 2147483648
      %v2179 = vor.u32 1.1754944e-38, %v2178
      %v2180 = vsel %vm2177, %v2179, %v2175
      %v2181 = vrcp.pop %v1954
      %v2182 = vmul.f32 %v1954, %v2181
      %v2183 = vsub.f32 1.0, %v2182
      %v2184 = vmul.f32 %v2181, %v2183
      %v2185 = vadd.f32 %v2181, %v2184
      %vm2186 = vweird.f32 %v1954
      %vm2187 = vweird.f32 %v2181
      %vm2188 = vmor %vm2186, %vm2187
      %v2189 = vsel %vm2188, %v2181, %v2185
      %v2190 = vand.u32 2147483647, %v1954
      %vm2191 = vcmp.eq.f32.partialorder %v2190, 8.507059e+37
      %v2192 = vand.u32 %v1954, 2147483648
      %v2193 = vor.u32 1.1754944e-38, %v2192
      %v2194 = vsel %vm2191, %v2193, %v2189
      %v2195 = vrcp.pop %v1955
      %v2196 = vmul.f32 %v1955, %v2195
      %v2197 = vsub.f32 1.0, %v2196
      %v2198 = vmul.f32 %v2195, %v2197
      %v2199 = vadd.f32 %v2195, %v2198
      %vm2200 = vweird.f32 %v1955
      %vm2201 = vweird.f32 %v2195
      %vm2202 = vmor %vm2200, %vm2201
      %v2203 = vsel %vm2202, %v2195, %v2199
      %v2204 = vand.u32 2147483647, %v1955
      %vm2205 = vcmp.eq.f32.partialorder %v2204, 8.507059e+37
      %v2206 = vand.u32 %v1955, 2147483648
      %v2207 = vor.u32 1.1754944e-38, %v2206
      %v2208 = vsel %vm2205, %v2207, %v2203
      %v2209 = vrcp.pop %v1956
      %v2210 = vmul.f32 %v1956, %v2209
      %v2211 = vsub.f32 1.0, %v2210
      %v2212 = vmul.f32 %v2209, %v2211
      %v2213 = vadd.f32 %v2209, %v2212
      %vm2214 = vweird.f32 %v1956
      %vm2215 = vweird.f32 %v2209
      %vm2216 = vmor %vm2214, %vm2215
      %v2217 = vsel %vm2216, %v2209, %v2213
      %v2218 = vand.u32 2147483647, %v1956
      %vm2219 = vcmp.eq.f32.partialorder %v2218, 8.507059e+37
      %v2220 = vand.u32 %v1956, 2147483648
      %v2221 = vor.u32 1.1754944e-38, %v2220
      %v2222 = vsel %vm2219, %v2221, %v2217
      %v2223 = vrcp.pop %v1957
      %v2224 = vmul.f32 %v1957, %v2223
      %v2225 = vsub.f32 1.0, %v2224
      %v2226 = vmul.f32 %v2223, %v2225
      %v2227 = vadd.f32 %v2223, %v2226
      %vm2228 = vweird.f32 %v1957
      %vm2229 = vweird.f32 %v2223
      %vm2230 = vmor %vm2228, %vm2229
      %v2231 = vsel %vm2230, %v2223, %v2227
      %v2232 = vand.u32 2147483647, %v1957
      %vm2233 = vcmp.eq.f32.partialorder %v2232, 8.507059e+37
      %v2234 = vand.u32 %v1957, 2147483648
      %v2235 = vor.u32 1.1754944e-38, %v2234
      %v2236 = vsel %vm2233, %v2235, %v2231
      %v2237 = vrcp.pop %v1958
      %v2238 = vmul.f32 %v1958, %v2237
      %v2239 = vsub.f32 1.0, %v2238
      %v2240 = vmul.f32 %v2237, %v2239
      %v2241 = vadd.f32 %v2237, %v2240
      %vm2242 = vweird.f32 %v1958
      %vm2243 = vweird.f32 %v2237
      %vm2244 = vmor %vm2242, %vm2243
      %v2245 = vsel %vm2244, %v2237, %v2241
      %v2246 = vand.u32 2147483647, %v1958
      %vm2247 = vcmp.eq.f32.partialorder %v2246, 8.507059e+37
      %v2248 = vand.u32 %v1958, 2147483648
      %v2249 = vor.u32 1.1754944e-38, %v2248
      %v2250 = vsel %vm2247, %v2249, %v2245
      %v2251 = vrcp.pop %v1959
      %v2252 = vmul.f32 %v1959, %v2251
      %v2253 = vsub.f32 1.0, %v2252
      %v2254 = vmul.f32 %v2251, %v2253
      %v2255 = vadd.f32 %v2251, %v2254
      %vm2256 = vweird.f32 %v1959
      %vm2257 = vweird.f32 %v2251
      %vm2258 = vmor %vm2256, %vm2257
      %v2259 = vsel %vm2258, %v2251, %v2255
      %v2260 = vand.u32 2147483647, %v1959
      %vm2261 = vcmp.eq.f32.partialorder %v2260, 8.507059e+37
      %v2262 = vand.u32 %v1959, 2147483648
      %v2263 = vor.u32 1.1754944e-38, %v2262
      %v2264 = vsel %vm2261, %v2263, %v2259
      %v2265 = vrcp.pop %v1960
      %v2266 = vmul.f32 %v1960, %v2265
      %v2267 = vsub.f32 1.0, %v2266
      %v2268 = vmul.f32 %v2265, %v2267
      %v2269 = vadd.f32 %v2265, %v2268
      %vm2270 = vweird.f32 %v1960
      %vm2271 = vweird.f32 %v2265
      %vm2272 = vmor %vm2270, %vm2271
      %v2273 = vsel %vm2272, %v2265, %v2269
      %v2274 = vand.u32 2147483647, %v1960
      %vm2275 = vcmp.eq.f32.partialorder %v2274, 8.507059e+37
      %v2276 = vand.u32 %v1960, 2147483648
      %v2277 = vor.u32 1.1754944e-38, %v2276
      %v2278 = vsel %vm2275, %v2277, %v2273
      %v2279 = vrcp.pop %v1961
      %v2280 = vmul.f32 %v1961, %v2279
      %v2281 = vsub.f32 1.0, %v2280
      %v2282 = vmul.f32 %v2279, %v2281
      %v2283 = vadd.f32 %v2279, %v2282
      %vm2284 = vweird.f32 %v1961
      %vm2285 = vweird.f32 %v2279
      %vm2286 = vmor %vm2284, %vm2285
      %v2287 = vsel %vm2286, %v2279, %v2283
      %v2288 = vand.u32 2147483647, %v1961
      %vm2289 = vcmp.eq.f32.partialorder %v2288, 8.507059e+37
      %v2290 = vand.u32 %v1961, 2147483648
      %v2291 = vor.u32 1.1754944e-38, %v2290
      %v2292 = vsel %vm2289, %v2291, %v2287
      %v2293 = vrcp.pop %v1962
      %v2294 = vmul.f32 %v1962, %v2293
      %v2295 = vsub.f32 1.0, %v2294
      %v2296 = vmul.f32 %v2293, %v2295
      %v2297 = vadd.f32 %v2293, %v2296
      %vm2298 = vweird.f32 %v1962
      %vm2299 = vweird.f32 %v2293
      %vm2300 = vmor %vm2298, %vm2299
      %v2301 = vsel %vm2300, %v2293, %v2297
      %v2302 = vand.u32 2147483647, %v1962
      %vm2303 = vcmp.eq.f32.partialorder %v2302, 8.507059e+37
      %v2304 = vand.u32 %v1962, 2147483648
      %v2305 = vor.u32 1.1754944e-38, %v2304
      %v2306 = vsel %vm2303, %v2305, %v2301
      %v2307 = vrcp.pop %v1963
      %v2308 = vmul.f32 %v1963, %v2307
      %v2309 = vsub.f32 1.0, %v2308
      %v2310 = vmul.f32 %v2307, %v2309
      %v2311 = vadd.f32 %v2307, %v2310
      %vm2312 = vweird.f32 %v1963
      %vm2313 = vweird.f32 %v2307
      %vm2314 = vmor %vm2312, %vm2313
      %v2315 = vsel %vm2314, %v2307, %v2311
      %v2316 = vand.u32 2147483647, %v1963
      %vm2317 = vcmp.eq.f32.partialorder %v2316, 8.507059e+37
      %v2318 = vand.u32 %v1963, 2147483648
      %v2319 = vor.u32 1.1754944e-38, %v2318
      %v2320 = vsel %vm2317, %v2319, %v2315
      %v2321 = vrcp.pop %v1964
      %v2322 = vmul.f32 %v1964, %v2321
      %v2323 = vsub.f32 1.0, %v2322
      %v2324 = vmul.f32 %v2321, %v2323
      %v2325 = vadd.f32 %v2321, %v2324
      %vm2326 = vweird.f32 %v1964
      %vm2327 = vweird.f32 %v2321
      %vm2328 = vmor %vm2326, %vm2327
      %v2329 = vsel %vm2328, %v2321, %v2325
      %v2330 = vand.u32 2147483647, %v1964
      %vm2331 = vcmp.eq.f32.partialorder %v2330, 8.507059e+37
      %v2332 = vand.u32 %v1964, 2147483648
      %v2333 = vor.u32 1.1754944e-38, %v2332
      %v2334 = vsel %vm2331, %v2333, %v2329
      %v2335 = vrcp.pop %v1965
      %v2336 = vmul.f32 %v1965, %v2335
      %v2337 = vsub.f32 1.0, %v2336
      %v2338 = vmul.f32 %v2335, %v2337
      %v2339 = vadd.f32 %v2335, %v2338
      %vm2340 = vweird.f32 %v1965
      %vm2341 = vweird.f32 %v2335
      %vm2342 = vmor %vm2340, %vm2341
      %v2343 = vsel %vm2342, %v2335, %v2339
      %v2344 = vand.u32 2147483647, %v1965
      %vm2345 = vcmp.eq.f32.partialorder %v2344, 8.507059e+37
      %v2346 = vand.u32 %v1965, 2147483648
      %v2347 = vor.u32 1.1754944e-38, %v2346
      %v2348 = vsel %vm2345, %v2347, %v2343
      %v2349 = vrcp.pop %v1966
      %v2350 = vmul.f32 %v1966, %v2349
      %v2351 = vsub.f32 1.0, %v2350
      %v2352 = vmul.f32 %v2349, %v2351
      %v2353 = vadd.f32 %v2349, %v2352
      %vm2354 = vweird.f32 %v1966
      %vm2355 = vweird.f32 %v2349
      %vm2356 = vmor %vm2354, %vm2355
      %v2357 = vsel %vm2356, %v2349, %v2353
      %v2358 = vand.u32 2147483647, %v1966
      %vm2359 = vcmp.eq.f32.partialorder %v2358, 8.507059e+37
      %v2360 = vand.u32 %v1966, 2147483648
      %v2361 = vor.u32 1.1754944e-38, %v2360
      %v2362 = vsel %vm2359, %v2361, %v2357
      %v2363 = vrcp.pop %v1967
      %v2364 = vmul.f32 %v1967, %v2363
      %v2365 = vsub.f32 1.0, %v2364
      %v2366 = vmul.f32 %v2363, %v2365
      %v2367 = vadd.f32 %v2363, %v2366
      %vm2368 = vweird.f32 %v1967
      %vm2369 = vweird.f32 %v2363
      %vm2370 = vmor %vm2368, %vm2369
      %v2371 = vsel %vm2370, %v2363, %v2367
      %v2372 = vand.u32 2147483647, %v1967
      %vm2373 = vcmp.eq.f32.partialorder %v2372, 8.507059e+37
      %v2374 = vand.u32 %v1967, 2147483648
      %v2375 = vor.u32 1.1754944e-38, %v2374
      %v2376 = vsel %vm2373, %v2375, %v2371
      %v2377 = vrcp.pop %v1968
      %v2378 = vmul.f32 %v1968, %v2377
      %v2379 = vsub.f32 1.0, %v2378
      %v2380 = vmul.f32 %v2377, %v2379
      %v2381 = vadd.f32 %v2377, %v2380
      %vm2382 = vweird.f32 %v1968
      %vm2383 = vweird.f32 %v2377
      %vm2384 = vmor %vm2382, %vm2383
      %v2385 = vsel %vm2384, %v2377, %v2381
      %v2386 = vand.u32 2147483647, %v1968
      %vm2387 = vcmp.eq.f32.partialorder %v2386, 8.507059e+37
      %v2388 = vand.u32 %v1968, 2147483648
      %v2389 = vor.u32 1.1754944e-38, %v2388
      %v2390 = vsel %vm2387, %v2389, %v2385
      %v2391 = vrcp.pop %v1969
      %v2392 = vmul.f32 %v1969, %v2391
      %v2393 = vsub.f32 1.0, %v2392
      %v2394 = vmul.f32 %v2391, %v2393
      %v2395 = vadd.f32 %v2391, %v2394
      %vm2396 = vweird.f32 %v1969
      %vm2397 = vweird.f32 %v2391
      %vm2398 = vmor %vm2396, %vm2397
      %v2399 = vsel %vm2398, %v2391, %v2395
      %v2400 = vand.u32 2147483647, %v1969
      %vm2401 = vcmp.eq.f32.partialorder %v2400, 8.507059e+37
      %v2402 = vand.u32 %v1969, 2147483648
      %v2403 = vor.u32 1.1754944e-38, %v2402
      %v2404 = vsel %vm2401, %v2403, %v2399
      %v2405 = vrcp.pop %v1970
      %v2406 = vmul.f32 %v1970, %v2405
      %v2407 = vsub.f32 1.0, %v2406
      %v2408 = vmul.f32 %v2405, %v2407
      %v2409 = vadd.f32 %v2405, %v2408
      %vm2410 = vweird.f32 %v1970
      %vm2411 = vweird.f32 %v2405
      %vm2412 = vmor %vm2410, %vm2411
      %v2413 = vsel %vm2412, %v2405, %v2409
      %v2414 = vand.u32 2147483647, %v1970
      %vm2415 = vcmp.eq.f32.partialorder %v2414, 8.507059e+37
      %v2416 = vand.u32 %v1970, 2147483648
      %v2417 = vor.u32 1.1754944e-38, %v2416
      %v2418 = vsel %vm2415, %v2417, %v2413
      %vm2419 = vcmask 7168
      %2420 = vst.msk [vmem:[%s357] sm:$0xff] %vm2419, %v1984
      %2421 = vst.msk [vmem:[%s357 + $0x8] sm:$0xff] %vm2419, %v1998
      %2422 = vst.msk [vmem:[%s357 + $0x10] sm:$0xff] %vm2419, %v2012
      %2423 = vst.msk [vmem:[%s357 + $0x18] sm:$0xff] %vm2419, %v2026
      %2424 = vst.msk [vmem:[%s357 + $0x20] sm:$0xff] %vm2419, %v2040
      %2425 = vst.msk [vmem:[%s357 + $0x28] sm:$0xff] %vm2419, %v2054
      %2426 = vst.msk [vmem:[%s357 + $0x30] sm:$0xff] %vm2419, %v2068
      %2427 = vst.msk [vmem:[%s357 + $0x38] sm:$0xff] %vm2419, %v2082
      %2428 = vst.msk [vmem:[%s357 + $0x40] sm:$0xff] %vm2419, %v2096
      %2429 = vst.msk [vmem:[%s357 + $0x48] sm:$0xff] %vm2419, %v2110
      %2430 = vst.msk [vmem:[%s357 + $0x50] sm:$0xff] %vm2419, %v2124
      %2431 = vst.msk [vmem:[%s357 + $0x58] sm:$0xff] %vm2419, %v2138
      %2432 = vst.msk [vmem:[%s357 + $0x60] sm:$0xff] %vm2419, %v2152
      %2433 = vst.msk [vmem:[%s357 + $0x68] sm:$0xff] %vm2419, %v2166
      %2434 = vst.msk [vmem:[%s357 + $0x70] sm:$0xff] %vm2419, %v2180
      %2435 = vst.msk [vmem:[%s357 + $0x78] sm:$0xff] %vm2419, %v2194
      %2436 = vst.msk [vmem:[%s357 + $0x80] sm:$0xff] %vm2419, %v2208
      %2437 = vst.msk [vmem:[%s357 + $0x88] sm:$0xff] %vm2419, %v2222
      %2438 = vst.msk [vmem:[%s357 + $0x90] sm:$0xff] %vm2419, %v2236
      %2439 = vst.msk [vmem:[%s357 + $0x98] sm:$0xff] %vm2419, %v2250
      %2440 = vst.msk [vmem:[%s357 + $0xa0] sm:$0xff] %vm2419, %v2264
      %2441 = vst.msk [vmem:[%s357 + $0xa8] sm:$0xff] %vm2419, %v2278
      %2442 = vst.msk [vmem:[%s357 + $0xb0] sm:$0xff] %vm2419, %v2292
      %2443 = vst.msk [vmem:[%s357 + $0xb8] sm:$0xff] %vm2419, %v2306
      %2444 = vst.msk [vmem:[%s357 + $0xc0] sm:$0xff] %vm2419, %v2320
      %2445 = vst.msk [vmem:[%s357 + $0xc8] sm:$0xff] %vm2419, %v2334
      %2446 = vst.msk [vmem:[%s357 + $0xd0] sm:$0xff] %vm2419, %v2348
      %2447 = vst.msk [vmem:[%s357 + $0xd8] sm:$0xff] %vm2419, %v2362
      %2448 = vst.msk [vmem:[%s357 + $0xe0] sm:$0xff] %vm2419, %v2376
      %2449 = vst.msk [vmem:[%s357 + $0xe8] sm:$0xff] %vm2419, %v2390
      %2450 = vst.msk [vmem:[%s357 + $0xf0] sm:$0xff] %vm2419, %v2404
      %2451 = vst.msk [vmem:[%s357 + $0xf8] sm:$0xff] %vm2419, %v2418
      %s2452 = smul.u32 32, %s21
      %p2453 = scmp.lt.s32.totalorder %s2452, 63
      %s2454 = scalar_select %p2453, %s2452, 63
      %s2455 = smul.addr %s2454, 8
      %s2456 = scalar_lea.vmem %s9, %s2455
      // Predicated region
      $region57: #{tpu_custom_call.1} parent=55 // pred_check
        %p2457 = pneg %p238
      $region58: #{tpu_custom_call.1} parent=55 // pred_check_branch
        %2459 = sbr.rel (%p2457) target = $region60
      $region59: #{tpu_custom_call.1} parent=55 // pred_region
        %s2460 = smul.u32 32, %s21
      $region60: #{tpu_custom_call.1} parent=55 // pred_fallthru
        _
    $region56: #{tpu_custom_call.1} parent=5 // pred_fallthru
      _
    %p2461 = scmp.le.s32.totalorder 2, %s16
    // Predicated region
    $region61: #{tpu_custom_call.1} parent=5 // pred_check
      %p2462 = pneg %p2461
    $region62: #{tpu_custom_call.1} parent=5 // pred_check_branch
      %2464 = sbr.rel (%p2462) target = $region64
    $region63: #{tpu_custom_call.1} parent=5 // pred_region
      %s2465 = ssub.s32 %s16, 2
      // Predicated region
      $region65: #{tpu_custom_call.1} parent=63 // pred_check
        %p2466 = pneg %p244
      $region66: #{tpu_custom_call.1} parent=63 // pred_check_branch
        %2468 = sbr.rel (%p2466) target = $region68
      $region67: #{tpu_custom_call.1} parent=63 // pred_region
        %s2469 = smul.u32 32, %s22
        %p2470 = scmp.lt.s32.totalorder %s2469, 63
        %s2471 = scalar_select %p2470, %s2469, 63
        %s2472 = smul.addr %s2471, 8
        %s2473 = scalar_lea.vmem %s9, %s2472
      $region68: #{tpu_custom_call.1} parent=63 // pred_fallthru
        _
    $region64: #{tpu_custom_call.1} parent=5 // pred_fallthru
      _
  $region6: #{tpu_custom_call.1} parent=0 // loop_footer
    %s20 = sadd.s32 1, %s16
  $region7: #{tpu_custom_call.1} parent=0 // loop_footer_branch
    %15 = sbr.rel target = $region3
  $region8: #{tpu_custom_call.1} parent=0 // loop_exit
    _

</llo_original>
